<compile_context>
chip_gen: v5e
topology: v5e:2x2
jax: 0.10.0
libtpu: 0.0.40
codegen_flags: <defaults>
</compile_context>

<pallas_src>
import functools

import jax
import jax.numpy as jnp
from jax.experimental import pallas as pl
from jax.experimental.pallas import tpu as pltpu


def _round_up(n, m):
    return ((n + m - 1) // m) * m


def sage_conv_kernel(adj_ref, xk_ref, x_rows_ref, inv_deg_ref, wcat_ref, b_ref,
                     out_ref, agg_ref, *, apply_relu: bool):
    """One (row-tile, K-tile) step of a mean-aggregation SAGEConv layer.

    adj_ref     : (TM, TK)        bf16 adjacency block (adj[i, j] = 1 iff j -> i)
    xk_ref      : (TK, F_in)      f32 features of this K-tile of source nodes
    x_rows_ref  : (TM, F_in)      f32 features of this tile's target nodes (root)
    inv_deg_ref : (TM, 1)         f32 precomputed 1/in-degree (0 if isolated)
    wcat_ref    : (2*F_in, Fo_p)  f32 concat([W_neigh, W_root], axis=0)
    b_ref       : (1, Fo_p)       f32 bias (lane-padded)
    out_ref     : (TM, Fo_p)
    agg_ref     : (TM, F_in)      f32 VMEM accumulator (neighbor feature sum)
    """
    k = pl.program_id(1)

    @pl.when(k == 0)
    def _():
        agg_ref[...] = jnp.zeros_like(agg_ref)

    # Partial neighbor sum on the MXU: bf16 inputs, f32 accumulation.
    agg_ref[...] += jnp.dot(adj_ref[...],
                            xk_ref[...].astype(jnp.bfloat16),
                            preferred_element_type=jnp.float32)

    @pl.when(k == pl.num_programs(1) - 1)
    def _():
        agg = agg_ref[...] * inv_deg_ref[...]                       # mean aggregation
        feat = jnp.concatenate([agg, x_rows_ref[...]], axis=-1)     # (TM, 2*F_in)
        out = jnp.dot(feat, wcat_ref[...], preferred_element_type=jnp.float32)
        out = out + b_ref[...]
        if apply_relu:
            out = jnp.maximum(out, 0.0)
        out_ref[...] = out.astype(out_ref.dtype)


def sage_conv(adj_bf16, x, inv_deg, w, w_root, bias, *, apply_relu,
              tile_m=256, tile_k=512):
    """One SAGEConv layer over an already N-padded graph.

    adj_bf16 : (Np, Np) bf16   inv_deg : (Np, 1) f32   x : (Np, F_in) f32
    w, w_root: (F_in, F_out)   bias: (F_out,)
    """
    n_pad = adj_bf16.shape[0]
    f_in = x.shape[1]
    f_out = w.shape[1]
    assert n_pad % tile_m == 0 and n_pad % tile_k == 0

    # Fuse the two output matmuls into one K = 2*F_in contraction; pad the
    # output lane dim to a multiple of 128 so stores are unmasked.
    f_out_p = _round_up(f_out, 128)
    w_cat = jnp.concatenate([w, w_root], axis=0)                    # (2*F_in, F_out)
    w_cat = jnp.pad(w_cat, ((0, 0), (0, f_out_p - f_out)))
    bias2d = jnp.pad(bias.reshape(1, f_out), ((0, 0), (0, f_out_p - f_out)))

    kernel = functools.partial(sage_conv_kernel, apply_relu=apply_relu)
    out = pl.pallas_call(
        kernel,
        out_shape=jax.ShapeDtypeStruct((n_pad, f_out_p), jnp.float32),
        grid_spec=pltpu.PrefetchScalarGridSpec(
            num_scalar_prefetch=0,
            grid=(n_pad // tile_m, n_pad // tile_k),
            in_specs=[
                pl.BlockSpec((tile_m, tile_k), lambda i, k: (i, k)),    # adj tile
                pl.BlockSpec((tile_k, f_in), lambda i, k: (k, 0)),      # x K-slab
                pl.BlockSpec((tile_m, f_in), lambda i, k: (i, 0)),      # x rows (root)
                pl.BlockSpec((tile_m, 1), lambda i, k: (i, 0)),         # inv_deg rows
                pl.BlockSpec((2 * f_in, f_out_p), lambda i, k: (0, 0)), # [W; W_root]
                pl.BlockSpec((1, f_out_p), lambda i, k: (0, 0)),        # bias
            ],
            out_specs=pl.BlockSpec((tile_m, f_out_p), lambda i, k: (i, 0)),
            scratch_shapes=[pltpu.VMEM((tile_m, f_in), jnp.float32)],
        ),
        compiler_params=pltpu.CompilerParams(
            # Row tiles across TensorCores (matters on v7x); K axis is the
            # reduction -> last and "arbitrary".
            dimension_semantics=("parallel", "arbitrary"),
            # Tiles above use ~2 MiB; keep the scoped budget explicit so the
            # same sizing is valid on v7x (64 MiB part) and v5e/v6e (128 MiB).
            vmem_limit_bytes=32 * 1024 * 1024,
        ),
    )(adj_bf16, x, x, inv_deg, w_cat, bias2d)

    return out[:, :f_out] if f_out_p != f_out else out


def graphsage_forward(x, adj, params, *, tile_m=256, tile_k=512):
    """Two-layer GraphSAGE (mean aggr): layer 0 ReLU, layer 1 linear."""
    n = x.shape[0]
    n_pad = _round_up(n, max(tile_m, tile_k))
    pad = n_pad - n

    # Degrees from the exact f32 0/1 adjacency (before the bf16 cast), once per
    # graph, shared by both layers.
    deg = jnp.sum(adj, axis=1, keepdims=True)
    inv_deg = jnp.where(deg > 0, 1.0 / deg, 0.0)

    adj_p = jnp.pad(adj, ((0, pad), (0, pad))).astype(jnp.bfloat16)
    x_p = jnp.pad(x, ((0, pad), (0, 0)))
    inv_deg_p = jnp.pad(inv_deg, ((0, pad), (0, 0)))

    h = sage_conv(adj_p, x_p, inv_deg_p, params["w0"], params["wr0"],
                  params["b0"], apply_relu=True, tile_m=tile_m, tile_k=tile_k)
    h = sage_conv(adj_p, h, inv_deg_p, params["w1"], params["wr1"],
                  params["b1"], apply_relu=False, tile_m=tile_m, tile_k=tile_k)
    return h[:n]


def _glorot(key, shape):
    fan_in, fan_out = shape
    limit = jnp.sqrt(6.0 / (fan_in + fan_out))
    return jax.random.uniform(key, shape, jnp.float32, -limit, limit)


def _reference(x, adj, params):
    """Pure-JAX f32 reference matching the PyTorch module semantics."""
    def layer(h, w, wr, b, relu):
        deg = adj.sum(axis=1, keepdims=True)
        inv = jnp.where(deg > 0, 1.0 / deg, 0.0)
        out = ((adj @ h) * inv) @ w + h @ wr + b
        return jnp.maximum(out, 0.0) if relu else out

    h = layer(x, params["w0"], params["wr0"], params["b0"], True)
    return layer(h, params["w1"], params["wr1"], params["b1"], False)


if __name__ == "__main__":
    # Small synthetic graph.  N is deliberately NOT a tile multiple so the
    # padding path is exercised; tiles are shrunk so the grid has multiple row
    # tiles AND multiple K (accumulation) steps.
    N = 500
    in_feats, n_hidden, n_classes = 64, 128, 32
    tile_m, tile_k = 128, 256

    key = jax.random.PRNGKey(0)
    k_x, k_adj, k_w0, k_wr0, k_w1, k_wr1 = jax.random.split(key, 6)

    x = jax.random.normal(k_x, (N, in_feats), jnp.float32)
    # Random sparse-ish directed graph (~4% density) as a dense 0/1 matrix.
    adj = jax.random.bernoulli(k_adj, 0.04, (N, N)).astype(jnp.float32)

    params = {
        "w0": _glorot(k_w0, (in_feats, n_hidden)),
        "wr0": _glorot(k_wr0, (in_feats, n_hidden)),
        "b0": jnp.zeros((n_hidden,), jnp.float32),
        "w1": _glorot(k_w1, (n_hidden, n_classes)),
        "wr1": _glorot(k_wr1, (n_hidden, n_classes)),
        "b1": jnp.zeros((n_classes,), jnp.float32),
    }

    fwd = jax.jit(functools.partial(graphsage_forward, tile_m=tile_m, tile_k=tile_k))
    out = jax.block_until_ready(fwd(x, adj, params))
    ref = _reference(x, adj, params)

    assert out.shape == (N, n_classes), out.shape
    # Aggregation runs on the bf16 MXU path (adjacency 0/1 is exact in bf16;
    # only x is rounded) with f32 accumulation -> compare against the pure-f32
    # reference with a correspondingly loosened tolerance.
    assert jnp.allclose(out, ref, atol=2e-2, rtol=2e-2), "mismatch vs reference"
    print("KERNEL_OK")
</pallas_src>

<mosaic_0001>
module attributes {stable_mosaic.version = 11 : i64} {
  func.func @sage_conv_kernel(%arg0: i32, %arg1: i32, %arg2: memref<128x256xbf16, #tpu.memory_space<vmem>>, %arg3: memref<256x64xf32, #tpu.memory_space<vmem>>, %arg4: memref<128x64xf32, #tpu.memory_space<vmem>>, %arg5: memref<128x1xf32, #tpu.memory_space<vmem>>, %arg6: memref<128x128xf32, #tpu.memory_space<vmem>>, %arg7: memref<1x128xf32, #tpu.memory_space<vmem>>, %arg8: memref<128x128xf32, #tpu.memory_space<vmem>>, %arg9: memref<128x64xf32, #tpu.memory_space<vmem>>) attributes {dimension_semantics = [#tpu.dimension_semantics<parallel>, #tpu.dimension_semantics<arbitrary>], iteration_bounds = array<i64: 4, 2>, scalar_prefetch = 0 : i64, scratch_operands = 1 : i64, tpu.core_type = #tpu.core_type<tc>, window_params = [{transform_indices = @transform_0, window_bounds = array<i64: 128, 256>}, {transform_indices = @transform_1, window_bounds = array<i64: 256, 64>}, {transform_indices = @transform_2, window_bounds = array<i64: 128, 64>}, {transform_indices = @transform_3, window_bounds = array<i64: 128, 1>}, {pipeline_mode = #tpu.pipeline_mode<synchronous>, transform_indices = @transform_4, window_bounds = array<i64: 128, 128>}, {pipeline_mode = #tpu.pipeline_mode<synchronous>, transform_indices = @transform_5, window_bounds = array<i64: 1, 128>}, {transform_indices = @transform_6, window_bounds = array<i64: 128, 128>}]} {
    %c0_i32 = arith.constant 0 : i32
    %0 = arith.cmpi eq, %arg1, %c0_i32 : i32
    %1 = arith.extui %0 : i1 to i32
    %c0_i32_0 = arith.constant 0 : i32
    %2 = arith.cmpi ne, %1, %c0_i32_0 : i32
    scf.if %2 {
      %cst_9 = arith.constant 0.000000e+00 : f32
      %13 = vector.broadcast %cst_9 : f32 to vector<128x64xf32>
      %c0_10 = arith.constant 0 : index
      %c0_11 = arith.constant 0 : index
      %14 = vector.load %arg9[%c0_10, %c0_11] : memref<128x64xf32, #tpu.memory_space<vmem>>, vector<128x64xf32>
      tpu.vector_store %arg9[%c0_10, %c0_11], %13 {strides = array<i32>} : memref<128x64xf32, #tpu.memory_space<vmem>>, vector<128x64xf32>,
    } else {
    }
    %c0 = arith.constant 0 : index
    %c0_1 = arith.constant 0 : index
    %3 = vector.load %arg9[%c0, %c0_1] : memref<128x64xf32, #tpu.memory_space<vmem>>, vector<128x64xf32>
    %c0_2 = arith.constant 0 : index
    %c0_3 = arith.constant 0 : index
    %4 = vector.load %arg2[%c0_2, %c0_3] : memref<128x256xbf16, #tpu.memory_space<vmem>>, vector<128x256xbf16>
    %c0_4 = arith.constant 0 : index
    %c0_5 = arith.constant 0 : index
    %5 = vector.load %arg3[%c0_4, %c0_5] : memref<256x64xf32, #tpu.memory_space<vmem>>, vector<256x64xf32>
    %6 = arith.truncf %5 : vector<256x64xf32> to vector<256x64xbf16>
    %cst = arith.constant dense<0.000000e+00> : vector<128x64xf32>
    %7 = tpu.matmul %4, %6, %cst {dimension_numbers = #tpu.dot_dimension_numbers<[1], [0], [0], [1], [0, 0, 1, 1], [], []>} : vector<128x256xbf16>, vector<256x64xbf16>, vector<128x64xf32> -> vector<128x64xf32>
    %8 = arith.addf %3, %7 : vector<128x64xf32>
    %c0_6 = arith.constant 0 : index
    %c0_7 = arith.constant 0 : index
    %9 = vector.load %arg9[%c0_6, %c0_7] : memref<128x64xf32, #tpu.memory_space<vmem>>, vector<128x64xf32>
    tpu.vector_store %arg9[%c0_6, %c0_7], %8 {strides = array<i32>} : memref<128x64xf32, #tpu.memory_space<vmem>>, vector<128x64xf32>,
    %c1_i32 = arith.constant 1 : i32
    %10 = arith.cmpi eq, %arg1, %c1_i32 : i32
    %11 = arith.extui %10 : i1 to i32
    %c0_i32_8 = arith.constant 0 : i32
    %12 = arith.cmpi ne, %11, %c0_i32_8 : i32
    scf.if %12 {
      %c0_9 = arith.constant 0 : index
      %c0_10 = arith.constant 0 : index
      %13 = vector.load %arg9[%c0_9, %c0_10] : memref<128x64xf32, #tpu.memory_space<vmem>>, vector<128x64xf32>
      %c0_11 = arith.constant 0 : index
      %c0_12 = arith.constant 0 : index
      %14 = vector.load %arg5[%c0_11, %c0_12] : memref<128x1xf32, #tpu.memory_space<vmem>>, vector<128x1xf32>
      %15 = vector.broadcast %14 : vector<128x1xf32> to vector<128x64xf32>
      %16 = arith.mulf %13, %15 : vector<128x64xf32>
      %c0_13 = arith.constant 0 : index
      %c0_14 = arith.constant 0 : index
      %17 = vector.load %arg4[%c0_13, %c0_14] : memref<128x64xf32, #tpu.memory_space<vmem>>, vector<128x64xf32>
      %18 = tpu.concatenate %16, %17 in 1 : vector<128x64xf32>, vector<128x64xf32> -> vector<128x128xf32>
      %c0_15 = arith.constant 0 : index
      %c0_16 = arith.constant 0 : index
      %19 = vector.load %arg6[%c0_15, %c0_16] : memref<128x128xf32, #tpu.memory_space<vmem>>, vector<128x128xf32>
      %cst_17 = arith.constant dense<0.000000e+00> : vector<128x128xf32>
      %20 = tpu.matmul %18, %19, %cst_17 {dimension_numbers = #tpu.dot_dimension_numbers<[1], [0], [0], [1], [0, 0, 1, 1], [], []>} : vector<128x128xf32>, vector<128x128xf32>, vector<128x128xf32> -> vector<128x128xf32>
      %c0_18 = arith.constant 0 : index
      %c0_19 = arith.constant 0 : index
      %21 = vector.load %arg7[%c0_18, %c0_19] : memref<1x128xf32, #tpu.memory_space<vmem>>, vector<1x128xf32>
      %22 = vector.broadcast %21 : vector<1x128xf32> to vector<128x128xf32>
      %23 = arith.addf %20, %22 : vector<128x128xf32>
      %cst_20 = arith.constant 0.000000e+00 : f32
      %24 = vector.broadcast %cst_20 : f32 to vector<128x128xf32>
      %25 = arith.maximumf %23, %24 : vector<128x128xf32>
      %c0_21 = arith.constant 0 : index
      %c0_22 = arith.constant 0 : index
      %26 = vector.load %arg8[%c0_21, %c0_22] : memref<128x128xf32, #tpu.memory_space<vmem>>, vector<128x128xf32>
      tpu.vector_store %arg8[%c0_21, %c0_22], %25 {strides = array<i32>} : memref<128x128xf32, #tpu.memory_space<vmem>>, vector<128x128xf32>,
    } else {
    }
    return
  }
  func.func @transform_0(%arg0: i32, %arg1: i32) -> (i32, i32) {
    %c0_i32 = arith.constant 0 : i32
    return %arg0, %arg1 : i32, i32
  }
  func.func @transform_1(%arg0: i32, %arg1: i32) -> (i32, i32) {
    %c0_i32 = arith.constant 0 : i32
    %c0_i32_0 = arith.constant 0 : i32
    return %arg1, %c0_i32 : i32, i32
  }
  func.func @transform_2(%arg0: i32, %arg1: i32) -> (i32, i32) {
    %c0_i32 = arith.constant 0 : i32
    %c0_i32_0 = arith.constant 0 : i32
    return %arg0, %c0_i32 : i32, i32
  }
  func.func @transform_3(%arg0: i32, %arg1: i32) -> (i32, i32) {
    %c0_i32 = arith.constant 0 : i32
    %c0_i32_0 = arith.constant 0 : i32
    return %arg0, %c0_i32 : i32, i32
  }
  func.func @transform_4(%arg0: i32, %arg1: i32) -> (i32, i32) {
    %c0_i32 = arith.constant 0 : i32
    %c0_i32_0 = arith.constant 0 : i32
    %c0_i32_1 = arith.constant 0 : i32
    return %c0_i32, %c0_i32_0 : i32, i32
  }
  func.func @transform_5(%arg0: i32, %arg1: i32) -> (i32, i32) {
    %c0_i32 = arith.constant 0 : i32
    %c0_i32_0 = arith.constant 0 : i32
    %c0_i32_1 = arith.constant 0 : i32
    return %c0_i32, %c0_i32_0 : i32, i32
  }
  func.func @transform_6(%arg0: i32, %arg1: i32) -> (i32, i32) {
    %c0_i32 = arith.constant 0 : i32
    %c0_i32_0 = arith.constant 0 : i32
    return %arg0, %c0_i32 : i32, i32
  }
}

module attributes {stable_mosaic.version = 11 : i64} {
  func.func @sage_conv_kernel(%arg0: i32, %arg1: i32, %arg2: memref<128x256xbf16, #tpu.memory_space<vmem>>, %arg3: memref<256x128xf32, #tpu.memory_space<vmem>>, %arg4: memref<128x128xf32, #tpu.memory_space<vmem>>, %arg5: memref<128x1xf32, #tpu.memory_space<vmem>>, %arg6: memref<256x128xf32, #tpu.memory_space<vmem>>, %arg7: memref<1x128xf32, #tpu.memory_space<vmem>>, %arg8: memref<128x128xf32, #tpu.memory_space<vmem>>, %arg9: memref<128x128xf32, #tpu.memory_space<vmem>>) attributes {dimension_semantics = [#tpu.dimension_semantics<parallel>, #tpu.dimension_semantics<arbitrary>], iteration_bounds = array<i64: 4, 2>, scalar_prefetch = 0 : i64, scratch_operands = 1 : i64, tpu.core_type = #tpu.core_type<tc>, window_params = [{transform_indices = @transform_0, window_bounds = array<i64: 128, 256>}, {transform_indices = @transform_1, window_bounds = array<i64: 256, 128>}, {transform_indices = @transform_2, window_bounds = array<i64: 128, 128>}, {transform_indices = @transform_3, window_bounds = array<i64: 128, 1>}, {pipeline_mode = #tpu.pipeline_mode<synchronous>, transform_indices = @transform_4, window_bounds = array<i64: 256, 128>}, {pipeline_mode = #tpu.pipeline_mode<synchronous>, transform_indices = @transform_5, window_bounds = array<i64: 1, 128>}, {transform_indices = @transform_6, window_bounds = array<i64: 128, 128>}]} {
    %c0_i32 = arith.constant 0 : i32
    %0 = arith.cmpi eq, %arg1, %c0_i32 : i32
    %1 = arith.extui %0 : i1 to i32
    %c0_i32_0 = arith.constant 0 : i32
    %2 = arith.cmpi ne, %1, %c0_i32_0 : i32
    scf.if %2 {
      %cst_9 = arith.constant 0.000000e+00 : f32
      %13 = vector.broadcast %cst_9 : f32 to vector<128x128xf32>
      %c0_10 = arith.constant 0 : index
      %c0_11 = arith.constant 0 : index
      %14 = vector.load %arg9[%c0_10, %c0_11] : memref<128x128xf32, #tpu.memory_space<vmem>>, vector<128x128xf32>
      tpu.vector_store %arg9[%c0_10, %c0_11], %13 {strides = array<i32>} : memref<128x128xf32, #tpu.memory_space<vmem>>, vector<128x128xf32>,
    } else {
    }
    %c0 = arith.constant 0 : index
    %c0_1 = arith.constant 0 : index
    %3 = vector.load %arg9[%c0, %c0_1] : memref<128x128xf32, #tpu.memory_space<vmem>>, vector<128x128xf32>
    %c0_2 = arith.constant 0 : index
    %c0_3 = arith.constant 0 : index
    %4 = vector.load %arg2[%c0_2, %c0_3] : memref<128x256xbf16, #tpu.memory_space<vmem>>, vector<128x256xbf16>
    %c0_4 = arith.constant 0 : index
    %c0_5 = arith.constant 0 : index
    %5 = vector.load %arg3[%c0_4, %c0_5] : memref<256x128xf32, #tpu.memory_space<vmem>>, vector<256x128xf32>
    %6 = arith.truncf %5 : vector<256x128xf32> to vector<256x128xbf16>
    %cst = arith.constant dense<0.000000e+00> : vector<128x128xf32>
    %7 = tpu.matmul %4, %6, %cst {dimension_numbers = #tpu.dot_dimension_numbers<[1], [0], [0], [1], [0, 0, 1, 1], [], []>} : vector<128x256xbf16>, vector<256x128xbf16>, vector<128x128xf32> -> vector<128x128xf32>
    %8 = arith.addf %3, %7 : vector<128x128xf32>
    %c0_6 = arith.constant 0 : index
    %c0_7 = arith.constant 0 : index
    %9 = vector.load %arg9[%c0_6, %c0_7] : memref<128x128xf32, #tpu.memory_space<vmem>>, vector<128x128xf32>
    tpu.vector_store %arg9[%c0_6, %c0_7], %8 {strides = array<i32>} : memref<128x128xf32, #tpu.memory_space<vmem>>, vector<128x128xf32>,
    %c1_i32 = arith.constant 1 : i32
    %10 = arith.cmpi eq, %arg1, %c1_i32 : i32
    %11 = arith.extui %10 : i1 to i32
    %c0_i32_8 = arith.constant 0 : i32
    %12 = arith.cmpi ne, %11, %c0_i32_8 : i32
    scf.if %12 {
      %c0_9 = arith.constant 0 : index
      %c0_10 = arith.constant 0 : index
      %13 = vector.load %arg9[%c0_9, %c0_10] : memref<128x128xf32, #tpu.memory_space<vmem>>, vector<128x128xf32>
      %c0_11 = arith.constant 0 : index
      %c0_12 = arith.constant 0 : index
      %14 = vector.load %arg5[%c0_11, %c0_12] : memref<128x1xf32, #tpu.memory_space<vmem>>, vector<128x1xf32>
      %15 = vector.broadcast %14 : vector<128x1xf32> to vector<128x128xf32>
      %16 = arith.mulf %13, %15 : vector<128x128xf32>
      %c0_13 = arith.constant 0 : index
      %c0_14 = arith.constant 0 : index
      %17 = vector.load %arg4[%c0_13, %c0_14] : memref<128x128xf32, #tpu.memory_space<vmem>>, vector<128x128xf32>
      %18 = tpu.concatenate %16, %17 in 1 : vector<128x128xf32>, vector<128x128xf32> -> vector<128x256xf32>
      %c0_15 = arith.constant 0 : index
      %c0_16 = arith.constant 0 : index
      %19 = vector.load %arg6[%c0_15, %c0_16] : memref<256x128xf32, #tpu.memory_space<vmem>>, vector<256x128xf32>
      %cst_17 = arith.constant dense<0.000000e+00> : vector<128x128xf32>
      %20 = tpu.matmul %18, %19, %cst_17 {dimension_numbers = #tpu.dot_dimension_numbers<[1], [0], [0], [1], [0, 0, 1, 1], [], []>} : vector<128x256xf32>, vector<256x128xf32>, vector<128x128xf32> -> vector<128x128xf32>
      %c0_18 = arith.constant 0 : index
      %c0_19 = arith.constant 0 : index
      %21 = vector.load %arg7[%c0_18, %c0_19] : memref<1x128xf32, #tpu.memory_space<vmem>>, vector<1x128xf32>
      %22 = vector.broadcast %21 : vector<1x128xf32> to vector<128x128xf32>
      %23 = arith.addf %20, %22 : vector<128x128xf32>
      %c0_20 = arith.constant 0 : index
      %c0_21 = arith.constant 0 : index
      %24 = vector.load %arg8[%c0_20, %c0_21] : memref<128x128xf32, #tpu.memory_space<vmem>>, vector<128x128xf32>
      tpu.vector_store %arg8[%c0_20, %c0_21], %23 {strides = array<i32>} : memref<128x128xf32, #tpu.memory_space<vmem>>, vector<128x128xf32>,
    } else {
    }
    return
  }
  func.func @transform_0(%arg0: i32, %arg1: i32) -> (i32, i32) {
    %c0_i32 = arith.constant 0 : i32
    return %arg0, %arg1 : i32, i32
  }
  func.func @transform_1(%arg0: i32, %arg1: i32) -> (i32, i32) {
    %c0_i32 = arith.constant 0 : i32
    %c0_i32_0 = arith.constant 0 : i32
    return %arg1, %c0_i32 : i32, i32
  }
  func.func @transform_2(%arg0: i32, %arg1: i32) -> (i32, i32) {
    %c0_i32 = arith.constant 0 : i32
    %c0_i32_0 = arith.constant 0 : i32
    return %arg0, %c0_i32 : i32, i32
  }
  func.func @transform_3(%arg0: i32, %arg1: i32) -> (i32, i32) {
    %c0_i32 = arith.constant 0 : i32
    %c0_i32_0 = arith.constant 0 : i32
    return %arg0, %c0_i32 : i32, i32
  }
  func.func @transform_4(%arg0: i32, %arg1: i32) -> (i32, i32) {
    %c0_i32 = arith.constant 0 : i32
    %c0_i32_0 = arith.constant 0 : i32
    %c0_i32_1 = arith.constant 0 : i32
    return %c0_i32, %c0_i32_0 : i32, i32
  }
  func.func @transform_5(%arg0: i32, %arg1: i32) -> (i32, i32) {
    %c0_i32 = arith.constant 0 : i32
    %c0_i32_0 = arith.constant 0 : i32
    %c0_i32_1 = arith.constant 0 : i32
    return %c0_i32, %c0_i32_0 : i32, i32
  }
  func.func @transform_6(%arg0: i32, %arg1: i32) -> (i32, i32) {
    %c0_i32 = arith.constant 0 : i32
    %c0_i32_0 = arith.constant 0 : i32
    return %arg0, %c0_i32 : i32, i32
  }
}

</mosaic_0001>

<llo_original>
// kernel: graphsage_forward.2
$region0: #{graphsage_forward.2}
  #allocation0 [shape = 'u32[]', space=smem, size = 0x4, offset = 0x4, fixed_abs, tag = 'smem constant byte address 0x4 - core index']
  #allocation1 [shape = 'u32[72,128]{1,0:T(1,128)}', space=vmem, size = 0x9000, scoped, tag = 'internal scratch']
  #allocation2 [shape = 'f32[128,64]{1,0:T(8,128)}', space=vmem, size = 0x10000, scoped, tag = 'scratch operand']
  %s0 = inlined_call_operand.vmem [shape: bf16[512,512], index: 0, kind: input, shape index: {}]
  %s1 = inlined_call_operand.vmem [shape: f32[512,64], index: 1, kind: input, shape index: {}, may-alias: {1,2}]
  %s2 = inlined_call_operand.vmem [shape: f32[512,64], index: 2, kind: input, shape index: {}, may-alias: {1,2}]
  %s3 = inlined_call_operand.vmem [shape: f32[512,1], index: 3, kind: input, shape index: {}]
  %s4 = inlined_call_operand.vmem [shape: f32[128,128], index: 4, kind: input, shape index: {}]
  %s5 = inlined_call_operand.vmem [shape: f32[1,128], index: 5, kind: input, shape index: {}]
  %s6 = inlined_call_operand.vmem [shape: f32[512,128], index: 6, kind: output, shape index: {}]
  %s7 = sld [smem:[#allocation0]]
  $region103: #{graphsage_forward.2} parent=0
    _
  %s9 = ssub.s32 1, %s7
  %s10 = scalar_select 0, %s9, %s7
  $region1: #{graphsage_forward.2} parent=0
    #allocation3 [shape = 'u8[131072]{0}', space=vmem, size = 0x20000, scoped, tag = 'input window, operand 0']
    loop: start=0, step=1, limit=10
    $region2: #{graphsage_forward.2} parent=1 // loop_pre_header
      _
    $region3: #{graphsage_forward.2} parent=1 // loop_header
      %s12 = sphi 0, %s16
      %p13 = scmp.ge.s32.totalorder %s12, 10
      %s19 = sphi 0, %s31
      %s20 = sphi 0, %s27
      %s21 = sphi 0, %s19
      %s22 = sphi 0, %s20
      %s23 = sphi 0, %s21
      %s24 = sphi 0, %s22
      %s36 = sphi 0, %s38
      %s39 = sphi 0, %s36
      %s40 = sphi 0, %s39
      %s56 = sphi 0, %s40
      %s62 = sphi 0, %s64
      %s65 = sphi 0, %s62
      %s66 = sphi 0, %s65
      %s82 = sphi 0, %s66
      %s88 = sphi 0, %s90
      %s91 = sphi 0, %s88
      %s92 = sphi 0, %s91
      %s108 = sphi 0, %s92
      %s114 = sphi 0, %s116
      %s117 = sphi 0, %s114
      %s118 = sphi 0, %s117
      %s134 = sphi 0, %s118
      %s138 = sphi 0, %s138
      %s140 = sphi 0, %s138
      %s141 = sphi 0, %s140
      %s155 = sphi 0, %s141
      %s159 = sphi 0, %s159
      %s161 = sphi 0, %s159
      %s162 = sphi 0, %s161
      %s176 = sphi 0, %s162
      %s182 = sphi 0, %s184
      %s185 = sphi 0, %s182
      %s186 = sphi 0, %s185
      %s202 = sphi 0, %s186
    $region4: #{graphsage_forward.2} parent=1 // loop_header_branch
      %15 = sbr.rel (%p13) target = $region8
    $region5: #{graphsage_forward.2} parent=1 // loop_body
      %s17 = ssub.s32 %s12, 1
      %s18 = ssub.s32 %s12, 2
      %s25 = sadd.s32 1, %s20
      %p26 = scmp.ge.s32.totalorder %s25, 2
      %s27 = scalar_select %p26, 0, %s25
      %s28 = sadd.s32 1, %s19
      %s29 = scalar_select %p26, %s28, %s19
      %p30 = scmp.ge.s32.totalorder %s29, 4
      %s31 = scalar_select %p30, 0, %s29
      %s32 = ssub.s32 %s19, %s31
      %s33 = ssub.s32 %s20, %s27
      %s34 = sor.u32 %s32, %s33
      %p35 = scmp.eq.s32.totalorder %s34, 0
      %s37 = sadd.s32 %s36, 1
      %s38 = scalar_select %p35, %s36, %s37
      %p41 = pneg %p35
      %p42 = scmp.eq.s32.totalorder %s12, 7
      %p43 = por %p41, %p42
      %p44 = scmp.ne.s32.totalorder %s36, %s39
      %p45 = scmp.eq.s32.totalorder %s12, 0
      %p46 = por %p44, %p45
      %p47 = scmp.ne.s32.totalorder %s36, %s39
      %p48 = scmp.eq.s32.totalorder %s17, 7
      %p49 = por %p47, %p48
      %p50 = scmp.ne.s32.totalorder %s39, %s40
      %p51 = scmp.eq.s32.totalorder %s17, 0
      %p52 = por %p50, %p51
      %p53 = scmp.ne.s32.totalorder %s39, %s40
      %p54 = scmp.eq.s32.totalorder %s18, 7
      %p55 = por %p53, %p54
      %p57 = scmp.ne.s32.totalorder %s40, %s56
      %p58 = scmp.eq.s32.totalorder %s18, 0
      %p59 = por %p57, %p58
      %s60 = ssub.s32 %s20, %s27
      %p61 = scmp.eq.s32.totalorder %s60, 0
      %s63 = sadd.s32 %s62, 1
      %s64 = scalar_select %p61, %s62, %s63
      %p67 = pneg %p61
      %p68 = scmp.eq.s32.totalorder %s12, 7
      %p69 = por %p67, %p68
      %p70 = scmp.ne.s32.totalorder %s62, %s65
      %p71 = scmp.eq.s32.totalorder %s12, 0
      %p72 = por %p70, %p71
      %p73 = scmp.ne.s32.totalorder %s62, %s65
      %p74 = scmp.eq.s32.totalorder %s17, 7
      %p75 = por %p73, %p74
      %p76 = scmp.ne.s32.totalorder %s65, %s66
      %p77 = scmp.eq.s32.totalorder %s17, 0
      %p78 = por %p76, %p77
      %p79 = scmp.ne.s32.totalorder %s65, %s66
      %p80 = scmp.eq.s32.totalorder %s18, 7
      %p81 = por %p79, %p80
      %p83 = scmp.ne.s32.totalorder %s66, %s82
      %p84 = scmp.eq.s32.totalorder %s18, 0
      %p85 = por %p83, %p84
      %s86 = ssub.s32 %s19, %s31
      %p87 = scmp.eq.s32.totalorder %s86, 0
      %s89 = sadd.s32 %s88, 1
      %s90 = scalar_select %p87, %s88, %s89
      %p93 = pneg %p87
      %p94 = scmp.eq.s32.totalorder %s12, 7
      %p95 = por %p93, %p94
      %p96 = scmp.ne.s32.totalorder %s88, %s91
      %p97 = scmp.eq.s32.totalorder %s12, 0
      %p98 = por %p96, %p97
      %p99 = scmp.ne.s32.totalorder %s88, %s91
      %p100 = scmp.eq.s32.totalorder %s17, 7
      %p101 = por %p99, %p100
      %p102 = scmp.ne.s32.totalorder %s91, %s92
      %p103 = scmp.eq.s32.totalorder %s17, 0
      %p104 = por %p102, %p103
      %p105 = scmp.ne.s32.totalorder %s91, %s92
      %p106 = scmp.eq.s32.totalorder %s18, 7
      %p107 = por %p105, %p106
      %p109 = scmp.ne.s32.totalorder %s92, %s108
      %p110 = scmp.eq.s32.totalorder %s18, 0
      %p111 = por %p109, %p110
      %s112 = ssub.s32 %s19, %s31
      %p113 = scmp.eq.s32.totalorder %s112, 0
      %s115 = sadd.s32 %s114, 1
      %s116 = scalar_select %p113, %s114, %s115
      %p119 = pneg %p113
      %p120 = scmp.eq.s32.totalorder %s12, 7
      %p121 = por %p119, %p120
      %p122 = scmp.ne.s32.totalorder %s114, %s117
      %p123 = scmp.eq.s32.totalorder %s12, 0
      %p124 = por %p122, %p123
      %p125 = scmp.ne.s32.totalorder %s114, %s117
      %p126 = scmp.eq.s32.totalorder %s17, 7
      %p127 = por %p125, %p126
      %p128 = scmp.ne.s32.totalorder %s117, %s118
      %p129 = scmp.eq.s32.totalorder %s17, 0
      %p130 = por %p128, %p129
      %p131 = scmp.ne.s32.totalorder %s117, %s118
      %p132 = scmp.eq.s32.totalorder %s18, 7
      %p133 = por %p131, %p132
      %p135 = scmp.ne.s32.totalorder %s118, %s134
      %p136 = scmp.eq.s32.totalorder %s18, 0
      %p137 = por %p135, %p136
      %s139 = sadd.s32 %s138, 1
      %p142 = scmp.eq.s32.totalorder %s12, 7
      %p143 = scmp.ne.s32.totalorder %s138, %s140
      %p144 = scmp.eq.s32.totalorder %s12, 0
      %p145 = por %p143, %p144
      %p146 = scmp.ne.s32.totalorder %s138, %s140
      %p147 = scmp.eq.s32.totalorder %s17, 7
      %p148 = por %p146, %p147
      %p149 = scmp.ne.s32.totalorder %s140, %s141
      %p150 = scmp.eq.s32.totalorder %s17, 0
      %p151 = por %p149, %p150
      %p152 = scmp.ne.s32.totalorder %s140, %s141
      %p153 = scmp.eq.s32.totalorder %s18, 7
      %p154 = por %p152, %p153
      %p156 = scmp.ne.s32.totalorder %s141, %s155
      %p157 = scmp.eq.s32.totalorder %s18, 0
      %p158 = por %p156, %p157
      %s160 = sadd.s32 %s159, 1
      %p163 = scmp.eq.s32.totalorder %s12, 7
      %p164 = scmp.ne.s32.totalorder %s159, %s161
      %p165 = scmp.eq.s32.totalorder %s12, 0
      %p166 = por %p164, %p165
      %p167 = scmp.ne.s32.totalorder %s159, %s161
      %p168 = scmp.eq.s32.totalorder %s17, 7
      %p169 = por %p167, %p168
      %p170 = scmp.ne.s32.totalorder %s161, %s162
      %p171 = scmp.eq.s32.totalorder %s17, 0
      %p172 = por %p170, %p171
      %p173 = scmp.ne.s32.totalorder %s161, %s162
      %p174 = scmp.eq.s32.totalorder %s18, 7
      %p175 = por %p173, %p174
      %p177 = scmp.ne.s32.totalorder %s162, %s176
      %p178 = scmp.eq.s32.totalorder %s18, 0
      %p179 = por %p177, %p178
      %s180 = ssub.s32 %s19, %s31
      %p181 = scmp.eq.s32.totalorder %s180, 0
      %s183 = sadd.s32 %s182, 1
      %s184 = scalar_select %p181, %s182, %s183
      %p187 = pneg %p181
      %p188 = scmp.eq.s32.totalorder %s12, 7
      %p189 = por %p187, %p188
      %p190 = scmp.ne.s32.totalorder %s182, %s185
      %p191 = scmp.eq.s32.totalorder %s12, 0
      %p192 = por %p190, %p191
      %p193 = scmp.ne.s32.totalorder %s182, %s185
      %p194 = scmp.eq.s32.totalorder %s17, 7
      %p195 = por %p193, %p194
      %p196 = scmp.ne.s32.totalorder %s185, %s186
      %p197 = scmp.eq.s32.totalorder %s17, 0
      %p198 = por %p196, %p197
      %p199 = scmp.ne.s32.totalorder %s185, %s186
      %p200 = scmp.eq.s32.totalorder %s18, 7
      %p201 = por %p199, %p200
      %p203 = scmp.ne.s32.totalorder %s186, %s202
      %p204 = scmp.eq.s32.totalorder %s18, 0
      %p205 = por %p203, %p204
      %p206 = scmp.le.s32.totalorder 1, %s12
      %p207 = scmp.lt.s32.totalorder %s12, 9
      %p208 = pnand %p206, %p207
      %p209 = pneg %p208
      // Predicated region
      $region9: #{graphsage_forward.2} parent=5 // pred_check
        _
      $region10: #{graphsage_forward.2} parent=5 // pred_check_branch
        %211 = sbr.rel (%p208) target = $region12
      $region11: #{graphsage_forward.2} parent=5 // pred_region
        %s212 = ssub.s32 %s12, 1
        // Predicated region
        $region13: #{graphsage_forward.2} parent=11 // pred_check
          %p213 = pneg %p151
        $region14: #{graphsage_forward.2} parent=11 // pred_check_branch
          %215 = sbr.rel (%p213) target = $region16
        $region15: #{graphsage_forward.2} parent=11 // pred_region
          _
        $region16: #{graphsage_forward.2} parent=11 // pred_fallthru
          _
        // Predicated region
        $region17: #{graphsage_forward.2} parent=11 // pred_check
          %p216 = pneg %p172
        $region18: #{graphsage_forward.2} parent=11 // pred_check_branch
          %218 = sbr.rel (%p216) target = $region20
        $region19: #{graphsage_forward.2} parent=11 // pred_region
          _
        $region20: #{graphsage_forward.2} parent=11 // pred_fallthru
          _
      $region12: #{graphsage_forward.2} parent=5 // pred_fallthru
        _
      %p219 = scmp.lt.s32.totalorder %s12, 8
      // Predicated region
      $region21: #{graphsage_forward.2} parent=5 // pred_check
        %p220 = pneg %p219
      $region22: #{graphsage_forward.2} parent=5 // pred_check_branch
        %222 = sbr.rel (%p220) target = $region24
      $region23: #{graphsage_forward.2} parent=5 // pred_region
        // Predicated region
        $region25: #{graphsage_forward.2} parent=23 // pred_check
          %p223 = pneg %p46
        $region26: #{graphsage_forward.2} parent=23 // pred_check_branch
          %225 = sbr.rel (%p223) target = $region28
        $region27: #{graphsage_forward.2} parent=23 // pred_region
          %s226 = sand.u32 %s36, 1
          %s227 = sand.u32 %s36, 1
          %s228 = smul.addr %s227, 128
          %s229 = scalar_lea.vmem [#allocation3], %s228
          %s230 = smul.u32 16, %s19
          %s231 = smul.u32 2, %s20
          %s232 = smul.addr %s230, 4
          %s233 = sadd.s32 %s231, %s232
          %s234 = smul.addr %s233, 4
          %s235 = scalar_lea.vmem %s0, %s234
          // Predicated region
          $region29: #{graphsage_forward.2} parent=27 // pred_check
            _
          $region30: #{graphsage_forward.2} parent=27 // pred_check_branch
            %237 = sbr.rel (0) target = $region32
          $region31: #{graphsage_forward.2} parent=27 // pred_region
            // Predicated region
            $region33: #{graphsage_forward.2} parent=31 // pred_check
              _
            $region34: #{graphsage_forward.2} parent=31 // pred_check_branch
              %239 = sbr.rel (0) target = $region36
            $region35: #{graphsage_forward.2} parent=31 // pred_region
              // Predicated region
              $region48: #{graphsage_forward.2} parent=35 // pred_check
                _
              $region49: #{graphsage_forward.2} parent=35 // pred_check_branch
                %285 = sbr.rel (0) target = $region51
              $region50: #{graphsage_forward.2} parent=35 // pred_region
                loop: start=0, step=1, limit=1
                $region52: #{graphsage_forward.2} parent=50 // loop_pre_header
                  _
                $region53: #{graphsage_forward.2} parent=50 // loop_header
                  %s287 = sphi 0, %s291
                  %p288 = scmp.ge.s32.totalorder %s287, 1
                  %s292 = sphi %s235, %s235
                  %s293 = sphi %s229, %s229
                $region54: #{graphsage_forward.2} parent=50 // loop_header_branch
                  %290 = sbr.rel (%p288) target = $region58
                $region55: #{graphsage_forward.2} parent=50 // loop_body
                  %v294 = vld [vmem:[%s292] sm:$0xff]
                  %295 = vst [vmem:[%s293] sm:$0xff] %v294
                  %v296 = vld [vmem:[%s292 + $0x10] sm:$0xff]
                  %297 = vst [vmem:[%s293 + $0x8] sm:$0xff] %v296
                  %v298 = vld [vmem:[%s292 + $0x20] sm:$0xff]
                  %299 = vst [vmem:[%s293 + $0x10] sm:$0xff] %v298
                  %v300 = vld [vmem:[%s292 + $0x30] sm:$0xff]
                  %301 = vst [vmem:[%s293 + $0x18] sm:$0xff] %v300
                  %v302 = vld [vmem:[%s292 + $0x40] sm:$0xff]
                  %303 = vst [vmem:[%s293 + $0x20] sm:$0xff] %v302
                  %v304 = vld [vmem:[%s292 + $0x50] sm:$0xff]
                  %305 = vst [vmem:[%s293 + $0x28] sm:$0xff] %v304
                  %v306 = vld [vmem:[%s292 + $0x60] sm:$0xff]
                  %307 = vst [vmem:[%s293 + $0x30] sm:$0xff] %v306
                  %v308 = vld [vmem:[%s292 + $0x70] sm:$0xff]
                  %309 = vst [vmem:[%s293 + $0x38] sm:$0xff] %v308
                  %v310 = vld [vmem:[%s292 + $0x80] sm:$0xff]
                  %311 = vst [vmem:[%s293 + $0x40] sm:$0xff] %v310
                  %v312 = vld [vmem:[%s292 + $0x90] sm:$0xff]
                  %313 = vst [vmem:[%s293 + $0x48] sm:$0xff] %v312
                  %v314 = vld [vmem:[%s292 + $0xa0] sm:$0xff]
                  %315 = vst [vmem:[%s293 + $0x50] sm:$0xff] %v314
                  %v316 = vld [vmem:[%s292 + $0xb0] sm:$0xff]
                  %317 = vst [vmem:[%s293 + $0x58] sm:$0xff] %v316
                  %v318 = vld [vmem:[%s292 + $0xc0] sm:$0xff]
                  %319 = vst [vmem:[%s293 + $0x60] sm:$0xff] %v318
                  %v320 = vld [vmem:[%s292 + $0xd0] sm:$0xff]
                  %321 = vst [vmem:[%s293 + $0x68] sm:$0xff] %v320
                  %v322 = vld [vmem:[%s292 + $0xe0] sm:$0xff]
                  %323 = vst [vmem:[%s293 + $0x70] sm:$0xff] %v322
                  %v324 = vld [vmem:[%s292 + $0xf0] sm:$0xff]
                  %325 = vst [vmem:[%s293 + $0x78] sm:$0xff] %v324
                $region56: #{graphsage_forward.2} parent=50 // loop_footer
                  %s291 = sadd.s32 1, %s287
                $region57: #{graphsage_forward.2} parent=50 // loop_footer_branch
                  %286 = sbr.rel target = $region53
                $region58: #{graphsage_forward.2} parent=50 // loop_exit
                  _
              $region51: #{graphsage_forward.2} parent=35 // pred_fallthru
                _
              // Predicated region
              $region59: #{graphsage_forward.2} parent=35 // pred_check
                _
              $region60: #{graphsage_forward.2} parent=35 // pred_check_branch
                %327 = sbr.rel target = $region62
              $region61: #{graphsage_forward.2} parent=35 // pred_region
                _
              $region62: #{graphsage_forward.2} parent=35 // pred_fallthru
                _
            $region36: #{graphsage_forward.2} parent=31 // pred_fallthru
              _
            // Predicated region
            $region37: #{graphsage_forward.2} parent=31 // pred_check
              _
            $region38: #{graphsage_forward.2} parent=31 // pred_check_branch
              %241 = sbr.rel target = $region40
            $region39: #{graphsage_forward.2} parent=31 // pred_region
              %s243 = ssub.s32 256, 1
              loop: start=0, step=1, limit=1
              $region41: #{graphsage_forward.2} parent=39 // loop_pre_header
                _
              $region42: #{graphsage_forward.2} parent=39 // loop_header
                %s245 = sphi 0, %s249
                %p246 = scmp.ge.s32.totalorder %s245, 1
                %s250 = sphi %s235, %s235
                %s251 = sphi %s229, %s229
              $region43: #{graphsage_forward.2} parent=39 // loop_header_branch
                %248 = sbr.rel (%p246) target = $region47
              $region44: #{graphsage_forward.2} parent=39 // loop_body
                %v252 = vld [vmem:[%s250] sm:%s243]
                %253 = vst [vmem:[%s251] sm:%s243] %v252
                %v254 = vld [vmem:[%s250 + $0x10] sm:%s243]
                %255 = vst [vmem:[%s251 + $0x8] sm:%s243] %v254
                %v256 = vld [vmem:[%s250 + $0x20] sm:%s243]
                %257 = vst [vmem:[%s251 + $0x10] sm:%s243] %v256
                %v258 = vld [vmem:[%s250 + $0x30] sm:%s243]
                %259 = vst [vmem:[%s251 + $0x18] sm:%s243] %v258
                %v260 = vld [vmem:[%s250 + $0x40] sm:%s243]
                %261 = vst [vmem:[%s251 + $0x20] sm:%s243] %v260
                %v262 = vld [vmem:[%s250 + $0x50] sm:%s243]
                %263 = vst [vmem:[%s251 + $0x28] sm:%s243] %v262
                %v264 = vld [vmem:[%s250 + $0x60] sm:%s243]
                %265 = vst [vmem:[%s251 + $0x30] sm:%s243] %v264
                %v266 = vld [vmem:[%s250 + $0x70] sm:%s243]
                %267 = vst [vmem:[%s251 + $0x38] sm:%s243] %v266
                %v268 = vld [vmem:[%s250 + $0x80] sm:%s243]
                %269 = vst [vmem:[%s251 + $0x40] sm:%s243] %v268
                %v270 = vld [vmem:[%s250 + $0x90] sm:%s243]
                %271 = vst [vmem:[%s251 + $0x48] sm:%s243] %v270
                %v272 = vld [vmem:[%s250 + $0xa0] sm:%s243]
                %273 = vst [vmem:[%s251 + $0x50] sm:%s243] %v272
                %v274 = vld [vmem:[%s250 + $0xb0] sm:%s243]
                %275 = vst [vmem:[%s251 + $0x58] sm:%s243] %v274
                %v276 = vld [vmem:[%s250 + $0xc0] sm:%s243]
                %277 = vst [vmem:[%s251 + $0x60] sm:%s243] %v276
                %v278 = vld [vmem:[%s250 + $0xd0] sm:%s243]
                %279 = vst [vmem:[%s251 + $0x68] sm:%s243] %v278
                %v280 = vld [vmem:[%s250 + $0xe0] sm:%s243]
                %281 = vst [vmem:[%s251 + $0x70] sm:%s243] %v280
                %v282 = vld [vmem:[%s250 + $0xf0] sm:%s243]
                %283 = vst [vmem:[%s251 + $0x78] sm:%s243] %v282
              $region45: #{graphsage_forward.2} parent=39 // loop_footer
                %s249 = sadd.s32 1, %s245
              $region46: #{graphsage_forward.2} parent=39 // loop_footer_branch
                %244 = sbr.rel target = $region42
              $region47: #{graphsage_forward.2} parent=39 // loop_exit
                _
            $region40: #{graphsage_forward.2} parent=31 // pred_fallthru
              _
          $region32: #{graphsage_forward.2} parent=27 // pred_fallthru
            _
          %328 = vnop
        $region28: #{graphsage_forward.2} parent=23 // pred_fallthru
          _
        // Predicated region
        $region63: #{graphsage_forward.2} parent=23 // pred_check
          %p329 = pneg %p72
        $region64: #{graphsage_forward.2} parent=23 // pred_check_branch
          %331 = sbr.rel (%p329) target = $region66
        $region65: #{graphsage_forward.2} parent=23 // pred_region
          %s332 = smul.u32 32, %s20
          %p333 = scmp.lt.s32.totalorder %s332, 63
          %s334 = scalar_select %p333, %s332, 63
          %s335 = smul.addr %s334, 8
          %s336 = scalar_lea.vmem %s1, %s335
          %s337 = smul.u32 32, %s20
        $region66: #{graphsage_forward.2} parent=23 // pred_fallthru
          _
        // Predicated region
        $region67: #{graphsage_forward.2} parent=23 // pred_check
          %p338 = pneg %p98
        $region68: #{graphsage_forward.2} parent=23 // pred_check_branch
          %340 = sbr.rel (%p338) target = $region70
        $region69: #{graphsage_forward.2} parent=23 // pred_region
          %s341 = smul.u32 16, %s19
          %p342 = scmp.lt.s32.totalorder %s341, 63
          %s343 = scalar_select %p342, %s341, 63
          %s344 = smul.addr %s343, 8
          %s345 = scalar_lea.vmem %s2, %s344
          %s346 = smul.u32 16, %s19
        $region70: #{graphsage_forward.2} parent=23 // pred_fallthru
          _
        // Predicated region
        $region71: #{graphsage_forward.2} parent=23 // pred_check
          %p347 = pneg %p124
        $region72: #{graphsage_forward.2} parent=23 // pred_check_branch
          %349 = sbr.rel (%p347) target = $region74
        $region73: #{graphsage_forward.2} parent=23 // pred_region
          %s350 = smul.u32 16, %s19
          %p351 = scmp.lt.s32.totalorder %s350, 63
          %s352 = scalar_select %p351, %s350, 63
          %s353 = smul.addr %s352, 8
          %s354 = scalar_lea.vmem %s3, %s353
          %s355 = smul.u32 16, %s19
        $region74: #{graphsage_forward.2} parent=23 // pred_fallthru
          _
      $region24: #{graphsage_forward.2} parent=5 // pred_fallthru
        _
      %p356 = scmp.le.s32.totalorder 1, %s12
      %p357 = scmp.lt.s32.totalorder %s12, 9
      %p358 = pnand %p356, %p357
      %p359 = pneg %p358
      // Predicated region
      $region75: #{graphsage_forward.2} parent=5 // pred_check
        _
      $region76: #{graphsage_forward.2} parent=5 // pred_check_branch
        %361 = sbr.rel (%p358) target = $region78
      $region77: #{graphsage_forward.2} parent=5 // pred_region
        %s362 = ssub.s32 %s12, 1
        %s363 = sand.u32 %s39, 1
        %s364 = sand.u32 %s39, 1
        %s365 = smul.addr %s364, 128
        %s366 = scalar_lea.vmem [#allocation3], %s365
        // Predicated region
        $region79: #{graphsage_forward.2} parent=77 // pred_check
          %p367 = pneg %p52
        $region80: #{graphsage_forward.2} parent=77 // pred_check_branch
          %369 = sbr.rel (%p367) target = $region82
        $region81: #{graphsage_forward.2} parent=77 // pred_region
          _
        $region82: #{graphsage_forward.2} parent=77 // pred_fallthru
          _
        %s370 = sand.u32 %s39, 1
        %s371 = sand.u32 %s39, 1
        %s372 = smul.addr %s371, 128
        %s373 = scalar_lea.vmem [#allocation3], %s372
        %p374 = pneg %p52
        %p375 = pneg %p49
        %s376 = smul.u32 32, %s22
        %p377 = scmp.lt.s32.totalorder %s376, 63
        %s378 = scalar_select %p377, %s376, 63
        %s379 = smul.addr %s378, 8
        %s380 = scalar_lea.vmem %s1, %s379
        %p381 = pneg %p78
        %p382 = pneg %p75
        %s383 = smul.u32 16, %s21
        %p384 = scmp.lt.s32.totalorder %s383, 63
        %s385 = scalar_select %p384, %s383, 63
        %s386 = smul.addr %s385, 8
        %s387 = scalar_lea.vmem %s2, %s386
        %p388 = pneg %p104
        %p389 = pneg %p101
        %s390 = smul.u32 16, %s21
        %p391 = scmp.lt.s32.totalorder %s390, 63
        %s392 = scalar_select %p391, %s390, 63
        %s393 = smul.addr %s392, 8
        %s394 = scalar_lea.vmem %s3, %s393
        %p395 = pneg %p130
        %p396 = pneg %p127
        %p397 = pneg %p151
        %p398 = pneg %p148
        %p399 = pneg %p172
        %p400 = pneg %p169
        %p401 = pneg %p198
        %p402 = pneg %p195
        %s403 = smul.u32 16, %s21
        %p404 = scmp.lt.s32.totalorder %s403, 63
        %s405 = scalar_select %p404, %s403, 63
        %s406 = smul.addr %s405, 8
        %s407 = scalar_lea.vmem %s6, %s406
        %s408 = smul.u32 16, %s21
        %s409 = smul.u32 2, %s22
        %s410 = smul.u32 32, %s22
        %p411 = scmp.lt.s32.totalorder %s410, 63
        %s412 = scalar_select %p411, %s410, 63
        %s413 = smul.addr %s412, 8
        %s414 = scalar_lea.vmem %s1, %s413
        %s415 = smul.u32 32, %s22
        %s416 = smul.u32 16, %s21
        %p417 = scmp.lt.s32.totalorder %s416, 63
        %s418 = scalar_select %p417, %s416, 63
        %s419 = smul.addr %s418, 8
        %s420 = scalar_lea.vmem %s2, %s419
        %s421 = smul.u32 16, %s21
        %s422 = smul.u32 16, %s21
        %p423 = scmp.lt.s32.totalorder %s422, 63
        %s424 = scalar_select %p423, %s422, 63
        %s425 = smul.addr %s424, 8
        %s426 = scalar_lea.vmem %s3, %s425
        %s427 = smul.u32 16, %s21
        %s428 = smul.u32 16, %s21
        %p429 = scmp.lt.s32.totalorder %s428, 63
        %s430 = scalar_select %p429, %s428, 63
        %s431 = smul.addr %s430, 8
        %s432 = scalar_lea.vmem %s6, %s431
        %s433 = smul.u32 16, %s21
        %p434 = scmp.eq.s32.totalorder %s22, 0
        // Predicated region
        $region83: #{graphsage_forward.2} parent=77 // pred_check
          %p435 = pneg %p434
        $region84: #{graphsage_forward.2} parent=77 // pred_check_branch
          %437 = sbr.rel (%p435) target = $region86
        $region85: #{graphsage_forward.2} parent=77 // pred_region
          %vm438 = vcmask 523264
          %439 = vst.msk [vmem:[#allocation2] sm:$0xff] %vm438, 0.0
          %440 = vst.msk [vmem:[#allocation2 + $0x8] sm:$0xff] %vm438, 0.0
          %441 = vst.msk [vmem:[#allocation2 + $0x10] sm:$0xff] %vm438, 0.0
          %442 = vst.msk [vmem:[#allocation2 + $0x18] sm:$0xff] %vm438, 0.0
          %443 = vst.msk [vmem:[#allocation2 + $0x20] sm:$0xff] %vm438, 0.0
          %444 = vst.msk [vmem:[#allocation2 + $0x28] sm:$0xff] %vm438, 0.0
          %445 = vst.msk [vmem:[#allocation2 + $0x30] sm:$0xff] %vm438, 0.0
          %446 = vst.msk [vmem:[#allocation2 + $0x38] sm:$0xff] %vm438, 0.0
          %447 = vst.msk [vmem:[#allocation2 + $0x40] sm:$0xff] %vm438, 0.0
          %448 = vst.msk [vmem:[#allocation2 + $0x48] sm:$0xff] %vm438, 0.0
          %449 = vst.msk [vmem:[#allocation2 + $0x50] sm:$0xff] %vm438, 0.0
          %450 = vst.msk [vmem:[#allocation2 + $0x58] sm:$0xff] %vm438, 0.0
          %451 = vst.msk [vmem:[#allocation2 + $0x60] sm:$0xff] %vm438, 0.0
          %452 = vst.msk [vmem:[#allocation2 + $0x68] sm:$0xff] %vm438, 0.0
          %453 = vst.msk [vmem:[#allocation2 + $0x70] sm:$0xff] %vm438, 0.0
          %454 = vst.msk [vmem:[#allocation2 + $0x78] sm:$0xff] %vm438, 0.0
        $region86: #{graphsage_forward.2} parent=77 // pred_fallthru
          _
        %v455 = vld [vmem:[#allocation2] sm:$0xff]
        %v456 = vld [vmem:[#allocation2 + $0x8] sm:$0xff]
        %v457 = vld [vmem:[#allocation2 + $0x10] sm:$0xff]
        %v458 = vld [vmem:[#allocation2 + $0x18] sm:$0xff]
        %v459 = vld [vmem:[#allocation2 + $0x20] sm:$0xff]
        %v460 = vld [vmem:[#allocation2 + $0x28] sm:$0xff]
        %v461 = vld [vmem:[#allocation2 + $0x30] sm:$0xff]
        %v462 = vld [vmem:[#allocation2 + $0x38] sm:$0xff]
        %v463 = vld [vmem:[#allocation2 + $0x40] sm:$0xff]
        %v464 = vld [vmem:[#allocation2 + $0x48] sm:$0xff]
        %v465 = vld [vmem:[#allocation2 + $0x50] sm:$0xff]
        %v466 = vld [vmem:[#allocation2 + $0x58] sm:$0xff]
        %v467 = vld [vmem:[#allocation2 + $0x60] sm:$0xff]
        %v468 = vld [vmem:[#allocation2 + $0x68] sm:$0xff]
        %v469 = vld [vmem:[#allocation2 + $0x70] sm:$0xff]
        %v470 = vld [vmem:[#allocation2 + $0x78] sm:$0xff]
        %v471 = vld [vmem:[%s366] sm:$0xff]
        %v472 = vld [vmem:[%s366 + $0x8] sm:$0xff]
        %v473 = vld [vmem:[%s366 + $0x10] sm:$0xff]
        %v474 = vld [vmem:[%s366 + $0x18] sm:$0xff]
        %v475 = vld [vmem:[%s366 + $0x20] sm:$0xff]
        %v476 = vld [vmem:[%s366 + $0x28] sm:$0xff]
        %v477 = vld [vmem:[%s366 + $0x30] sm:$0xff]
        %v478 = vld [vmem:[%s366 + $0x38] sm:$0xff]
        %v479 = vld [vmem:[%s366 + $0x40] sm:$0xff]
        %v480 = vld [vmem:[%s366 + $0x48] sm:$0xff]
        %v481 = vld [vmem:[%s366 + $0x50] sm:$0xff]
        %v482 = vld [vmem:[%s366 + $0x58] sm:$0xff]
        %v483 = vld [vmem:[%s366 + $0x60] sm:$0xff]
        %v484 = vld [vmem:[%s366 + $0x68] sm:$0xff]
        %v485 = vld [vmem:[%s366 + $0x70] sm:$0xff]
        %v486 = vld [vmem:[%s366 + $0x78] sm:$0xff]
        %v487 = vld [vmem:[%s414] sm:$0xff]
        %v488 = vld [vmem:[%s414 + $0x8] sm:$0xff]
        %v489 = vld [vmem:[%s414 + $0x10] sm:$0xff]
        %v490 = vld [vmem:[%s414 + $0x18] sm:$0xff]
        %v491 = vld [vmem:[%s414 + $0x20] sm:$0xff]
        %v492 = vld [vmem:[%s414 + $0x28] sm:$0xff]
        %v493 = vld [vmem:[%s414 + $0x30] sm:$0xff]
        %v494 = vld [vmem:[%s414 + $0x38] sm:$0xff]
        %v495 = vld [vmem:[%s414 + $0x40] sm:$0xff]
        %v496 = vld [vmem:[%s414 + $0x48] sm:$0xff]
        %v497 = vld [vmem:[%s414 + $0x50] sm:$0xff]
        %v498 = vld [vmem:[%s414 + $0x58] sm:$0xff]
        %v499 = vld [vmem:[%s414 + $0x60] sm:$0xff]
        %v500 = vld [vmem:[%s414 + $0x68] sm:$0xff]
        %v501 = vld [vmem:[%s414 + $0x70] sm:$0xff]
        %v502 = vld [vmem:[%s414 + $0x78] sm:$0xff]
        %v503 = vld [vmem:[%s414 + $0x80] sm:$0xff]
        %v504 = vld [vmem:[%s414 + $0x88] sm:$0xff]
        %v505 = vld [vmem:[%s414 + $0x90] sm:$0xff]
        %v506 = vld [vmem:[%s414 + $0x98] sm:$0xff]
        %v507 = vld [vmem:[%s414 + $0xa0] sm:$0xff]
        %v508 = vld [vmem:[%s414 + $0xa8] sm:$0xff]
        %v509 = vld [vmem:[%s414 + $0xb0] sm:$0xff]
        %v510 = vld [vmem:[%s414 + $0xb8] sm:$0xff]
        %v511 = vld [vmem:[%s414 + $0xc0] sm:$0xff]
        %v512 = vld [vmem:[%s414 + $0xc8] sm:$0xff]
        %v513 = vld [vmem:[%s414 + $0xd0] sm:$0xff]
        %v514 = vld [vmem:[%s414 + $0xd8] sm:$0xff]
        %v515 = vld [vmem:[%s414 + $0xe0] sm:$0xff]
        %v516 = vld [vmem:[%s414 + $0xe8] sm:$0xff]
        %v517 = vld [vmem:[%s414 + $0xf0] sm:$0xff]
        %v518 = vld [vmem:[%s414 + $0xf8] sm:$0xff]
        %v519 = vpack.c.bf16 %v488, %v487
        %v520 = vpack.c.bf16 %v490, %v489
        %v521 = vpack.c.bf16 %v492, %v491
        %v522 = vpack.c.bf16 %v494, %v493
        %v523 = vpack.c.bf16 %v496, %v495
        %v524 = vpack.c.bf16 %v498, %v497
        %v525 = vpack.c.bf16 %v500, %v499
        %v526 = vpack.c.bf16 %v502, %v501
        %v527 = vpack.c.bf16 %v504, %v503
        %v528 = vpack.c.bf16 %v506, %v505
        %v529 = vpack.c.bf16 %v508, %v507
        %v530 = vpack.c.bf16 %v510, %v509
        %v531 = vpack.c.bf16 %v512, %v511
        %v532 = vpack.c.bf16 %v514, %v513
        %v533 = vpack.c.bf16 %v516, %v515
        %v534 = vpack.c.bf16 %v518, %v517
        %v551 = vunpack.c.l.b16 %v471
        %v552 = vunpack.c.h.b16 %v471
        %v553 = vunpack.c.l.b16 %v472
        %v554 = vunpack.c.h.b16 %v472
        %v555 = vunpack.c.l.b16 %v473
        %v556 = vunpack.c.h.b16 %v473
        %v557 = vunpack.c.l.b16 %v474
        %v558 = vunpack.c.h.b16 %v474
        %v559 = vunpack.c.l.b16 %v475
        %v560 = vunpack.c.h.b16 %v475
        %v561 = vunpack.c.l.b16 %v476
        %v562 = vunpack.c.h.b16 %v476
        %v563 = vunpack.c.l.b16 %v477
        %v564 = vunpack.c.h.b16 %v477
        %v565 = vunpack.c.l.b16 %v478
        %v566 = vunpack.c.h.b16 %v478
        %v567 = vunpack.c.l.b16 %v479
        %v568 = vunpack.c.h.b16 %v479
        %v569 = vunpack.c.l.b16 %v480
        %v570 = vunpack.c.h.b16 %v480
        %v571 = vunpack.c.l.b16 %v481
        %v572 = vunpack.c.h.b16 %v481
        %v573 = vunpack.c.l.b16 %v482
        %v574 = vunpack.c.h.b16 %v482
        %v575 = vunpack.c.l.b16 %v483
        %v576 = vunpack.c.h.b16 %v483
        %v577 = vunpack.c.l.b16 %v484
        %v578 = vunpack.c.h.b16 %v484
        %v579 = vunpack.c.l.b16 %v485
        %v580 = vunpack.c.h.b16 %v485
        %v581 = vunpack.c.l.b16 %v486
        %v582 = vunpack.c.h.b16 %v486
        %v583 = vpack.c.b16 %v553, %v551
        %v584 = vpack.c.b16 %v554, %v552
        %v585 = vpack.c.b16 %v557, %v555
        %v586 = vpack.c.b16 %v558, %v556
        %v587 = vpack.c.b16 %v561, %v559
        %v588 = vpack.c.b16 %v562, %v560
        %v589 = vpack.c.b16 %v565, %v563
        %v590 = vpack.c.b16 %v566, %v564
        %v591 = vpack.c.b16 %v569, %v567
        %v592 = vpack.c.b16 %v570, %v568
        %v593 = vpack.c.b16 %v573, %v571
        %v594 = vpack.c.b16 %v574, %v572
        %v595 = vpack.c.b16 %v577, %v575
        %v596 = vpack.c.b16 %v578, %v576
        %v597 = vpack.c.b16 %v581, %v579
        %v598 = vpack.c.b16 %v582, %v580
        %615 = vmatpush.bf16.msra.mxu0 %v526
        %616 = vmatpush.bf16.msra.mxu0 %v525
        %617 = vmatpush.bf16.msra.mxu0 %v524
        %618 = vmatpush.bf16.msra.mxu0 %v523
        %619 = vmatpush.bf16.msra.mxu0 %v522
        %620 = vmatpush.bf16.msra.mxu0 %v521
        %621 = vmatpush.bf16.msra.mxu0 %v520
        %622 = vmatpush.bf16.msra.mxu0 %v519
        %623 = vmatmul.bf16.gmra.mxu0 %v583
        %v624 = vpop.f32.mrf.mxu0
        %v625 = vadd.f32 0.0, %v624
        %v626 = vpop.f32.mrf.mxu0
        %v627 = vadd.f32 0.0, %v626
        %628 = vmatmul.bf16.gmra.mxu0 %v585
        %v629 = vpop.f32.mrf.mxu0
        %v630 = vadd.f32 0.0, %v629
        %v631 = vpop.f32.mrf.mxu0
        %v632 = vadd.f32 0.0, %v631
        %633 = vmatmul.bf16.gmra.mxu0 %v587
        %v634 = vpop.f32.mrf.mxu0
        %v635 = vadd.f32 0.0, %v634
        %v636 = vpop.f32.mrf.mxu0
        %v637 = vadd.f32 0.0, %v636
        %638 = vmatmul.bf16.gmra.mxu0 %v589
        %v639 = vpop.f32.mrf.mxu0
        %v640 = vadd.f32 0.0, %v639
        %v641 = vpop.f32.mrf.mxu0
        %v642 = vadd.f32 0.0, %v641
        %643 = vmatmul.bf16.gmra.mxu0 %v591
        %v644 = vpop.f32.mrf.mxu0
        %v645 = vadd.f32 0.0, %v644
        %v646 = vpop.f32.mrf.mxu0
        %v647 = vadd.f32 0.0, %v646
        %648 = vmatmul.bf16.gmra.mxu0 %v593
        %v649 = vpop.f32.mrf.mxu0
        %v650 = vadd.f32 0.0, %v649
        %v651 = vpop.f32.mrf.mxu0
        %v652 = vadd.f32 0.0, %v651
        %653 = vmatmul.bf16.gmra.mxu0 %v595
        %v654 = vpop.f32.mrf.mxu0
        %v655 = vadd.f32 0.0, %v654
        %v656 = vpop.f32.mrf.mxu0
        %v657 = vadd.f32 0.0, %v656
        %658 = vmatmul.bf16.gmra.mxu0 %v597
        %v659 = vpop.f32.mrf.mxu0
        %v660 = vadd.f32 0.0, %v659
        %v661 = vpop.f32.mrf.mxu0
        %v662 = vadd.f32 0.0, %v661
        %663 = vdwg.mxu0
        %664 = vmatpush.bf16.msra.mxu0 %v534
        %665 = vmatpush.bf16.msra.mxu0 %v533
        %666 = vmatpush.bf16.msra.mxu0 %v532
        %667 = vmatpush.bf16.msra.mxu0 %v531
        %668 = vmatpush.bf16.msra.mxu0 %v530
        %669 = vmatpush.bf16.msra.mxu0 %v529
        %670 = vmatpush.bf16.msra.mxu0 %v528
        %671 = vmatpush.bf16.msra.mxu0 %v527
        %672 = vmatmul.bf16.gmra.mxu0 %v584
        %v673 = vpop.f32.mrf.mxu0
        %v674 = vadd.f32 %v625, %v673
        %v675 = vpop.f32.mrf.mxu0
        %v676 = vadd.f32 %v627, %v675
        %677 = vmatmul.bf16.gmra.mxu0 %v586
        %v678 = vpop.f32.mrf.mxu0
        %v679 = vadd.f32 %v630, %v678
        %v680 = vpop.f32.mrf.mxu0
        %v681 = vadd.f32 %v632, %v680
        %682 = vmatmul.bf16.gmra.mxu0 %v588
        %v683 = vpop.f32.mrf.mxu0
        %v684 = vadd.f32 %v635, %v683
        %v685 = vpop.f32.mrf.mxu0
        %v686 = vadd.f32 %v637, %v685
        %687 = vmatmul.bf16.gmra.mxu0 %v590
        %v688 = vpop.f32.mrf.mxu0
        %v689 = vadd.f32 %v640, %v688
        %v690 = vpop.f32.mrf.mxu0
        %v691 = vadd.f32 %v642, %v690
        %692 = vmatmul.bf16.gmra.mxu0 %v592
        %v693 = vpop.f32.mrf.mxu0
        %v694 = vadd.f32 %v645, %v693
        %v695 = vpop.f32.mrf.mxu0
        %v696 = vadd.f32 %v647, %v695
        %697 = vmatmul.bf16.gmra.mxu0 %v594
        %v698 = vpop.f32.mrf.mxu0
        %v699 = vadd.f32 %v650, %v698
        %v700 = vpop.f32.mrf.mxu0
        %v701 = vadd.f32 %v652, %v700
        %702 = vmatmul.bf16.gmra.mxu0 %v596
        %v703 = vpop.f32.mrf.mxu0
        %v704 = vadd.f32 %v655, %v703
        %v705 = vpop.f32.mrf.mxu0
        %v706 = vadd.f32 %v657, %v705
        %707 = vmatmul.bf16.gmra.mxu0 %v598
        %v708 = vpop.f32.mrf.mxu0
        %v709 = vadd.f32 %v660, %v708
        %v710 = vpop.f32.mrf.mxu0
        %v711 = vadd.f32 %v662, %v710
        %712 = vdwg.mxu0
        %v713 = vadd.f32 %v455, %v674
        %v714 = vadd.f32 %v456, %v676
        %v715 = vadd.f32 %v457, %v679
        %v716 = vadd.f32 %v458, %v681
        %v717 = vadd.f32 %v459, %v684
        %v718 = vadd.f32 %v460, %v686
        %v719 = vadd.f32 %v461, %v689
        %v720 = vadd.f32 %v462, %v691
        %v721 = vadd.f32 %v463, %v694
        %v722 = vadd.f32 %v464, %v696
        %v723 = vadd.f32 %v465, %v699
        %v724 = vadd.f32 %v466, %v701
        %v725 = vadd.f32 %v467, %v704
        %v726 = vadd.f32 %v468, %v706
        %v727 = vadd.f32 %v469, %v709
        %v728 = vadd.f32 %v470, %v711
        %vm729 = vcmask 523264
        %730 = vst.msk [vmem:[#allocation2] sm:$0xff] %vm729, %v713
        %731 = vst.msk [vmem:[#allocation2 + $0x8] sm:$0xff] %vm729, %v714
        %732 = vst.msk [vmem:[#allocation2 + $0x10] sm:$0xff] %vm729, %v715
        %733 = vst.msk [vmem:[#allocation2 + $0x18] sm:$0xff] %vm729, %v716
        %734 = vst.msk [vmem:[#allocation2 + $0x20] sm:$0xff] %vm729, %v717
        %735 = vst.msk [vmem:[#allocation2 + $0x28] sm:$0xff] %vm729, %v718
        %736 = vst.msk [vmem:[#allocation2 + $0x30] sm:$0xff] %vm729, %v719
        %737 = vst.msk [vmem:[#allocation2 + $0x38] sm:$0xff] %vm729, %v720
        %738 = vst.msk [vmem:[#allocation2 + $0x40] sm:$0xff] %vm729, %v721
        %739 = vst.msk [vmem:[#allocation2 + $0x48] sm:$0xff] %vm729, %v722
        %740 = vst.msk [vmem:[#allocation2 + $0x50] sm:$0xff] %vm729, %v723
        %741 = vst.msk [vmem:[#allocation2 + $0x58] sm:$0xff] %vm729, %v724
        %742 = vst.msk [vmem:[#allocation2 + $0x60] sm:$0xff] %vm729, %v725
        %743 = vst.msk [vmem:[#allocation2 + $0x68] sm:$0xff] %vm729, %v726
        %744 = vst.msk [vmem:[#allocation2 + $0x70] sm:$0xff] %vm729, %v727
        %745 = vst.msk [vmem:[#allocation2 + $0x78] sm:$0xff] %vm729, %v728
        %p746 = scmp.eq.s32.totalorder %s22, 1
        // Predicated region
        $region87: #{graphsage_forward.2} parent=77 // pred_check
          %p747 = pneg %p746
        $region88: #{graphsage_forward.2} parent=77 // pred_check_branch
          %749 = sbr.rel (%p747) target = $region90
        $region89: #{graphsage_forward.2} parent=77 // pred_region
          %v750 = vld [vmem:[#allocation2] sm:$0xff]
          %v751 = vld [vmem:[#allocation2 + $0x8] sm:$0xff]
          %v752 = vld [vmem:[#allocation2 + $0x10] sm:$0xff]
          %v753 = vld [vmem:[#allocation2 + $0x18] sm:$0xff]
          %v754 = vld [vmem:[#allocation2 + $0x20] sm:$0xff]
          %v755 = vld [vmem:[#allocation2 + $0x28] sm:$0xff]
          %v756 = vld [vmem:[#allocation2 + $0x30] sm:$0xff]
          %v757 = vld [vmem:[#allocation2 + $0x38] sm:$0xff]
          %v758 = vld [vmem:[#allocation2 + $0x40] sm:$0xff]
          %v759 = vld [vmem:[#allocation2 + $0x48] sm:$0xff]
          %v760 = vld [vmem:[#allocation2 + $0x50] sm:$0xff]
          %v761 = vld [vmem:[#allocation2 + $0x58] sm:$0xff]
          %v762 = vld [vmem:[#allocation2 + $0x60] sm:$0xff]
          %v763 = vld [vmem:[#allocation2 + $0x68] sm:$0xff]
          %v764 = vld [vmem:[#allocation2 + $0x70] sm:$0xff]
          %v765 = vld [vmem:[#allocation2 + $0x78] sm:$0xff]
          %v766 = vld [vmem:[%s426] sm:$0xff]
          %v767 = vld [vmem:[%s426 + $0x8] sm:$0xff]
          %v768 = vld [vmem:[%s426 + $0x10] sm:$0xff]
          %v769 = vld [vmem:[%s426 + $0x18] sm:$0xff]
          %v770 = vld [vmem:[%s426 + $0x20] sm:$0xff]
          %v771 = vld [vmem:[%s426 + $0x28] sm:$0xff]
          %v772 = vld [vmem:[%s426 + $0x30] sm:$0xff]
          %v773 = vld [vmem:[%s426 + $0x38] sm:$0xff]
          %v774 = vld [vmem:[%s426 + $0x40] sm:$0xff]
          %v775 = vld [vmem:[%s426 + $0x48] sm:$0xff]
          %v776 = vld [vmem:[%s426 + $0x50] sm:$0xff]
          %v777 = vld [vmem:[%s426 + $0x58] sm:$0xff]
          %v778 = vld [vmem:[%s426 + $0x60] sm:$0xff]
          %v779 = vld [vmem:[%s426 + $0x68] sm:$0xff]
          %v780 = vld [vmem:[%s426 + $0x70] sm:$0xff]
          %v781 = vld [vmem:[%s426 + $0x78] sm:$0xff]
          %783 = vset.pattern.permute.xlu0 0
          %784 = vperm.xlu0 %783, %v766
          %v785 = vpop.permute.xlu0 %784
          %788 = vset.pattern.permute.xlu0 0
          %789 = vperm.xlu0 %788, %v767
          %v790 = vpop.permute.xlu0 %789
          %793 = vset.pattern.permute.xlu0 0
          %794 = vperm.xlu0 %793, %v768
          %v795 = vpop.permute.xlu0 %794
          %798 = vset.pattern.permute.xlu0 0
          %799 = vperm.xlu0 %798, %v769
          %v800 = vpop.permute.xlu0 %799
          %803 = vset.pattern.permute.xlu0 0
          %804 = vperm.xlu0 %803, %v770
          %v805 = vpop.permute.xlu0 %804
          %808 = vset.pattern.permute.xlu0 0
          %809 = vperm.xlu0 %808, %v771
          %v810 = vpop.permute.xlu0 %809
          %813 = vset.pattern.permute.xlu0 0
          %814 = vperm.xlu0 %813, %v772
          %v815 = vpop.permute.xlu0 %814
          %818 = vset.pattern.permute.xlu0 0
          %819 = vperm.xlu0 %818, %v773
          %v820 = vpop.permute.xlu0 %819
          %823 = vset.pattern.permute.xlu0 0
          %824 = vperm.xlu0 %823, %v774
          %v825 = vpop.permute.xlu0 %824
          %828 = vset.pattern.permute.xlu0 0
          %829 = vperm.xlu0 %828, %v775
          %v830 = vpop.permute.xlu0 %829
          %833 = vset.pattern.permute.xlu0 0
          %834 = vperm.xlu0 %833, %v776
          %v835 = vpop.permute.xlu0 %834
          %838 = vset.pattern.permute.xlu0 0
          %839 = vperm.xlu0 %838, %v777
          %v840 = vpop.permute.xlu0 %839
          %843 = vset.pattern.permute.xlu0 0
          %844 = vperm.xlu0 %843, %v778
          %v845 = vpop.permute.xlu0 %844
          %848 = vset.pattern.permute.xlu0 0
          %849 = vperm.xlu0 %848, %v779
          %v850 = vpop.permute.xlu0 %849
          %853 = vset.pattern.permute.xlu0 0
          %854 = vperm.xlu0 %853, %v780
          %v855 = vpop.permute.xlu0 %854
          %858 = vset.pattern.permute.xlu0 0
          %859 = vperm.xlu0 %858, %v781
          %v860 = vpop.permute.xlu0 %859
          %v862 = vmul.f32 %v750, %v785
          %v863 = vmul.f32 %v751, %v790
          %v864 = vmul.f32 %v752, %v795
          %v865 = vmul.f32 %v753, %v800
          %v866 = vmul.f32 %v754, %v805
          %v867 = vmul.f32 %v755, %v810
          %v868 = vmul.f32 %v756, %v815
          %v869 = vmul.f32 %v757, %v820
          %v870 = vmul.f32 %v758, %v825
          %v871 = vmul.f32 %v759, %v830
          %v872 = vmul.f32 %v760, %v835
          %v873 = vmul.f32 %v761, %v840
          %v874 = vmul.f32 %v762, %v845
          %v875 = vmul.f32 %v763, %v850
          %v876 = vmul.f32 %v764, %v855
          %v877 = vmul.f32 %v765, %v860
          %v878 = vld [vmem:[%s420] sm:$0xff]
          %v879 = vld [vmem:[%s420 + $0x8] sm:$0xff]
          %v880 = vld [vmem:[%s420 + $0x10] sm:$0xff]
          %v881 = vld [vmem:[%s420 + $0x18] sm:$0xff]
          %v882 = vld [vmem:[%s420 + $0x20] sm:$0xff]
          %v883 = vld [vmem:[%s420 + $0x28] sm:$0xff]
          %v884 = vld [vmem:[%s420 + $0x30] sm:$0xff]
          %v885 = vld [vmem:[%s420 + $0x38] sm:$0xff]
          %v886 = vld [vmem:[%s420 + $0x40] sm:$0xff]
          %v887 = vld [vmem:[%s420 + $0x48] sm:$0xff]
          %v888 = vld [vmem:[%s420 + $0x50] sm:$0xff]
          %v889 = vld [vmem:[%s420 + $0x58] sm:$0xff]
          %v890 = vld [vmem:[%s420 + $0x60] sm:$0xff]
          %v891 = vld [vmem:[%s420 + $0x68] sm:$0xff]
          %v892 = vld [vmem:[%s420 + $0x70] sm:$0xff]
          %v893 = vld [vmem:[%s420 + $0x78] sm:$0xff]
          %910 = vrot.lane.b32.xlu0 %v878, 64
          %v911 = vpop.permute.xlu0 %910
          %912 = vrot.lane.b32.xlu0 %v879, 64
          %v913 = vpop.permute.xlu0 %912
          %914 = vrot.lane.b32.xlu0 %v880, 64
          %v915 = vpop.permute.xlu0 %914
          %916 = vrot.lane.b32.xlu0 %v881, 64
          %v917 = vpop.permute.xlu0 %916
          %918 = vrot.lane.b32.xlu0 %v882, 64
          %v919 = vpop.permute.xlu0 %918
          %920 = vrot.lane.b32.xlu0 %v883, 64
          %v921 = vpop.permute.xlu0 %920
          %922 = vrot.lane.b32.xlu0 %v884, 64
          %v923 = vpop.permute.xlu0 %922
          %924 = vrot.lane.b32.xlu0 %v885, 64
          %v925 = vpop.permute.xlu0 %924
          %926 = vrot.lane.b32.xlu0 %v886, 64
          %v927 = vpop.permute.xlu0 %926
          %928 = vrot.lane.b32.xlu0 %v887, 64
          %v929 = vpop.permute.xlu0 %928
          %930 = vrot.lane.b32.xlu0 %v888, 64
          %v931 = vpop.permute.xlu0 %930
          %932 = vrot.lane.b32.xlu0 %v889, 64
          %v933 = vpop.permute.xlu0 %932
          %934 = vrot.lane.b32.xlu0 %v890, 64
          %v935 = vpop.permute.xlu0 %934
          %936 = vrot.lane.b32.xlu0 %v891, 64
          %v937 = vpop.permute.xlu0 %936
          %938 = vrot.lane.b32.xlu0 %v892, 64
          %v939 = vpop.permute.xlu0 %938
          %940 = vrot.lane.b32.xlu0 %v893, 64
          %v941 = vpop.permute.xlu0 %940
          %v958 = vsel %vm729, %v862, %v911
          %v959 = vsel %vm729, %v863, %v913
          %v960 = vsel %vm729, %v864, %v915
          %v961 = vsel %vm729, %v865, %v917
          %v962 = vsel %vm729, %v866, %v919
          %v963 = vsel %vm729, %v867, %v921
          %v964 = vsel %vm729, %v868, %v923
          %v965 = vsel %vm729, %v869, %v925
          %v966 = vsel %vm729, %v870, %v927
          %v967 = vsel %vm729, %v871, %v929
          %v968 = vsel %vm729, %v872, %v931
          %v969 = vsel %vm729, %v873, %v933
          %v970 = vsel %vm729, %v874, %v935
          %v971 = vsel %vm729, %v875, %v937
          %v972 = vsel %vm729, %v876, %v939
          %v973 = vsel %vm729, %v877, %v941
          %v974 = vld [vmem:[%s4] sm:$0xff]
          %v975 = vld [vmem:[%s4 + $0x8] sm:$0xff]
          %v976 = vld [vmem:[%s4 + $0x10] sm:$0xff]
          %v977 = vld [vmem:[%s4 + $0x18] sm:$0xff]
          %v978 = vld [vmem:[%s4 + $0x20] sm:$0xff]
          %v979 = vld [vmem:[%s4 + $0x28] sm:$0xff]
          %v980 = vld [vmem:[%s4 + $0x30] sm:$0xff]
          %v981 = vld [vmem:[%s4 + $0x38] sm:$0xff]
          %v982 = vld [vmem:[%s4 + $0x40] sm:$0xff]
          %v983 = vld [vmem:[%s4 + $0x48] sm:$0xff]
          %v984 = vld [vmem:[%s4 + $0x50] sm:$0xff]
          %v985 = vld [vmem:[%s4 + $0x58] sm:$0xff]
          %v986 = vld [vmem:[%s4 + $0x60] sm:$0xff]
          %v987 = vld [vmem:[%s4 + $0x68] sm:$0xff]
          %v988 = vld [vmem:[%s4 + $0x70] sm:$0xff]
          %v989 = vld [vmem:[%s4 + $0x78] sm:$0xff]
          %v990 = vld [vmem:[%s5] sm:$0x1]
          %v992 = vperm.slane %v990, 0
          %994 = vmatpush.msra.mxu0 %v989
          %995 = vmatpush.msra.mxu0 %v988
          %996 = vmatpush.msra.mxu0 %v987
          %997 = vmatpush.msra.mxu0 %v986
          %998 = vmatpush.msra.mxu0 %v985
          %999 = vmatpush.msra.mxu0 %v984
          %1000 = vmatpush.msra.mxu0 %v983
          %1001 = vmatpush.msra.mxu0 %v982
          %1002 = vmatpush.msra.mxu0 %v981
          %1003 = vmatpush.msra.mxu0 %v980
          %1004 = vmatpush.msra.mxu0 %v979
          %1005 = vmatpush.msra.mxu0 %v978
          %1006 = vmatpush.msra.mxu0 %v977
          %1007 = vmatpush.msra.mxu0 %v976
          %1008 = vmatpush.msra.mxu0 %v975
          %1009 = vmatpush.msra.mxu0 %v974
          %1010 = vmatmul.f32.gmra.mxu0 %v958
          %v1011 = vpop.f32.mrf.mxu0
          %v1012 = vadd.f32 %v992, %v1011
          %1013 = vmatmul.f32.gmra.mxu0 %v959
          %v1014 = vpop.f32.mrf.mxu0
          %v1015 = vadd.f32 %v992, %v1014
          %1016 = vmatmul.f32.gmra.mxu0 %v960
          %v1017 = vpop.f32.mrf.mxu0
          %v1018 = vadd.f32 %v992, %v1017
          %1019 = vmatmul.f32.gmra.mxu0 %v961
          %v1020 = vpop.f32.mrf.mxu0
          %v1021 = vadd.f32 %v992, %v1020
          %1022 = vmatmul.f32.gmra.mxu0 %v962
          %v1023 = vpop.f32.mrf.mxu0
          %v1024 = vadd.f32 %v992, %v1023
          %1025 = vmatmul.f32.gmra.mxu0 %v963
          %v1026 = vpop.f32.mrf.mxu0
          %v1027 = vadd.f32 %v992, %v1026
          %1028 = vmatmul.f32.gmra.mxu0 %v964
          %v1029 = vpop.f32.mrf.mxu0
          %v1030 = vadd.f32 %v992, %v1029
          %1031 = vmatmul.f32.gmra.mxu0 %v965
          %v1032 = vpop.f32.mrf.mxu0
          %v1033 = vadd.f32 %v992, %v1032
          %1034 = vmatmul.f32.gmra.mxu0 %v966
          %v1035 = vpop.f32.mrf.mxu0
          %v1036 = vadd.f32 %v992, %v1035
          %1037 = vmatmul.f32.gmra.mxu0 %v967
          %v1038 = vpop.f32.mrf.mxu0
          %v1039 = vadd.f32 %v992, %v1038
          %1040 = vmatmul.f32.gmra.mxu0 %v968
          %v1041 = vpop.f32.mrf.mxu0
          %v1042 = vadd.f32 %v992, %v1041
          %1043 = vmatmul.f32.gmra.mxu0 %v969
          %v1044 = vpop.f32.mrf.mxu0
          %v1045 = vadd.f32 %v992, %v1044
          %1046 = vmatmul.f32.gmra.mxu0 %v970
          %v1047 = vpop.f32.mrf.mxu0
          %v1048 = vadd.f32 %v992, %v1047
          %1049 = vmatmul.f32.gmra.mxu0 %v971
          %v1050 = vpop.f32.mrf.mxu0
          %v1051 = vadd.f32 %v992, %v1050
          %1052 = vmatmul.f32.gmra.mxu0 %v972
          %v1053 = vpop.f32.mrf.mxu0
          %v1054 = vadd.f32 %v992, %v1053
          %1055 = vmatmul.f32.gmra.mxu0 %v973
          %v1056 = vpop.f32.mrf.mxu0
          %v1057 = vadd.f32 %v992, %v1056
          %1058 = vdwg.mxu0
          %v1059 = vmax.f32 %v1012, 0.0
          %v1060 = vmax.f32 %v1015, 0.0
          %v1061 = vmax.f32 %v1018, 0.0
          %v1062 = vmax.f32 %v1021, 0.0
          %v1063 = vmax.f32 %v1024, 0.0
          %v1064 = vmax.f32 %v1027, 0.0
          %v1065 = vmax.f32 %v1030, 0.0
          %v1066 = vmax.f32 %v1033, 0.0
          %v1067 = vmax.f32 %v1036, 0.0
          %v1068 = vmax.f32 %v1039, 0.0
          %v1069 = vmax.f32 %v1042, 0.0
          %v1070 = vmax.f32 %v1045, 0.0
          %v1071 = vmax.f32 %v1048, 0.0
          %v1072 = vmax.f32 %v1051, 0.0
          %v1073 = vmax.f32 %v1054, 0.0
          %v1074 = vmax.f32 %v1057, 0.0
          %1075 = vst [vmem:[%s432] sm:$0xff] %v1059
          %1076 = vst [vmem:[%s432 + $0x8] sm:$0xff] %v1060
          %1077 = vst [vmem:[%s432 + $0x10] sm:$0xff] %v1061
          %1078 = vst [vmem:[%s432 + $0x18] sm:$0xff] %v1062
          %1079 = vst [vmem:[%s432 + $0x20] sm:$0xff] %v1063
          %1080 = vst [vmem:[%s432 + $0x28] sm:$0xff] %v1064
          %1081 = vst [vmem:[%s432 + $0x30] sm:$0xff] %v1065
          %1082 = vst [vmem:[%s432 + $0x38] sm:$0xff] %v1066
          %1083 = vst [vmem:[%s432 + $0x40] sm:$0xff] %v1067
          %1084 = vst [vmem:[%s432 + $0x48] sm:$0xff] %v1068
          %1085 = vst [vmem:[%s432 + $0x50] sm:$0xff] %v1069
          %1086 = vst [vmem:[%s432 + $0x58] sm:$0xff] %v1070
          %1087 = vst [vmem:[%s432 + $0x60] sm:$0xff] %v1071
          %1088 = vst [vmem:[%s432 + $0x68] sm:$0xff] %v1072
          %1089 = vst [vmem:[%s432 + $0x70] sm:$0xff] %v1073
          %1090 = vst [vmem:[%s432 + $0x78] sm:$0xff] %v1074
        $region90: #{graphsage_forward.2} parent=77 // pred_fallthru
          _
        %s1091 = smul.u32 16, %s21
        %p1092 = scmp.lt.s32.totalorder %s1091, 63
        %s1093 = scalar_select %p1092, %s1091, 63
        %s1094 = smul.addr %s1093, 8
        %s1095 = scalar_lea.vmem %s6, %s1094
        // Predicated region
        $region91: #{graphsage_forward.2} parent=77 // pred_check
          %p1096 = pneg %p195
        $region92: #{graphsage_forward.2} parent=77 // pred_check_branch
          %1098 = sbr.rel (%p1096) target = $region94
        $region93: #{graphsage_forward.2} parent=77 // pred_region
          %s1099 = smul.u32 16, %s21
        $region94: #{graphsage_forward.2} parent=77 // pred_fallthru
          _
      $region78: #{graphsage_forward.2} parent=5 // pred_fallthru
        _
      %p1100 = scmp.le.s32.totalorder 2, %s12
      // Predicated region
      $region95: #{graphsage_forward.2} parent=5 // pred_check
        %p1101 = pneg %p1100
      $region96: #{graphsage_forward.2} parent=5 // pred_check_branch
        %1103 = sbr.rel (%p1101) target = $region98
      $region97: #{graphsage_forward.2} parent=5 // pred_region
        %s1104 = ssub.s32 %s12, 2
        // Predicated region
        $region99: #{graphsage_forward.2} parent=97 // pred_check
          %p1105 = pneg %p201
        $region100: #{graphsage_forward.2} parent=97 // pred_check_branch
          %1107 = sbr.rel (%p1105) target = $region102
        $region101: #{graphsage_forward.2} parent=97 // pred_region
          %s1108 = smul.u32 16, %s23
          %p1109 = scmp.lt.s32.totalorder %s1108, 63
          %s1110 = scalar_select %p1109, %s1108, 63
          %s1111 = smul.addr %s1110, 8
          %s1112 = scalar_lea.vmem %s6, %s1111
        $region102: #{graphsage_forward.2} parent=97 // pred_fallthru
          _
      $region98: #{graphsage_forward.2} parent=5 // pred_fallthru
        _
    $region6: #{graphsage_forward.2} parent=1 // loop_footer
      %s16 = sadd.s32 1, %s12
    $region7: #{graphsage_forward.2} parent=1 // loop_footer_branch
      %11 = sbr.rel target = $region3
    $region8: #{graphsage_forward.2} parent=1 // loop_exit
      _

// kernel: graphsage_forward.3
$region0: #{graphsage_forward.3}
  #allocation0 [shape = 'u32[]', space=smem, size = 0x4, offset = 0x4, fixed_abs, tag = 'smem constant byte address 0x4 - core index']
  #allocation1 [shape = 'u32[72,128]{1,0:T(1,128)}', space=vmem, size = 0x9000, scoped, tag = 'internal scratch']
  #allocation2 [shape = 'f32[128,128]{1,0:T(8,128)}', space=vmem, size = 0x10000, scoped, tag = 'scratch operand']
  %s0 = inlined_call_operand.vmem [shape: bf16[512,512], index: 0, kind: input, shape index: {}]
  %s1 = inlined_call_operand.vmem [shape: f32[512,128], index: 1, kind: input, shape index: {}, may-alias: {1,2}]
  %s2 = inlined_call_operand.vmem [shape: f32[512,128], index: 2, kind: input, shape index: {}, may-alias: {1,2}]
  %s3 = inlined_call_operand.vmem [shape: f32[512,1], index: 3, kind: input, shape index: {}]
  %s4 = inlined_call_operand.vmem [shape: f32[256,128], index: 4, kind: input, shape index: {}]
  %s5 = inlined_call_operand.vmem [shape: f32[1,128], index: 5, kind: input, shape index: {}]
  %s6 = inlined_call_operand.vmem [shape: f32[512,128], index: 6, kind: output, shape index: {}]
  %s7 = sld [smem:[#allocation0]]
  $region103: #{graphsage_forward.3} parent=0
    _
  %s9 = ssub.s32 1, %s7
  %s10 = scalar_select 0, %s9, %s7
  $region1: #{graphsage_forward.3} parent=0
    #allocation3 [shape = 'u8[131072]{0}', space=vmem, size = 0x20000, scoped, tag = 'input window, operand 0']
    loop: start=0, step=1, limit=10
    $region2: #{graphsage_forward.3} parent=1 // loop_pre_header
      _
    $region3: #{graphsage_forward.3} parent=1 // loop_header
      %s12 = sphi 0, %s16
      %p13 = scmp.ge.s32.totalorder %s12, 10
      %s19 = sphi 0, %s31
      %s20 = sphi 0, %s27
      %s21 = sphi 0, %s19
      %s22 = sphi 0, %s20
      %s23 = sphi 0, %s21
      %s24 = sphi 0, %s22
      %s36 = sphi 0, %s38
      %s39 = sphi 0, %s36
      %s40 = sphi 0, %s39
      %s56 = sphi 0, %s40
      %s62 = sphi 0, %s64
      %s65 = sphi 0, %s62
      %s66 = sphi 0, %s65
      %s82 = sphi 0, %s66
      %s88 = sphi 0, %s90
      %s91 = sphi 0, %s88
      %s92 = sphi 0, %s91
      %s108 = sphi 0, %s92
      %s114 = sphi 0, %s116
      %s117 = sphi 0, %s114
      %s118 = sphi 0, %s117
      %s134 = sphi 0, %s118
      %s138 = sphi 0, %s138
      %s140 = sphi 0, %s138
      %s141 = sphi 0, %s140
      %s155 = sphi 0, %s141
      %s159 = sphi 0, %s159
      %s161 = sphi 0, %s159
      %s162 = sphi 0, %s161
      %s176 = sphi 0, %s162
      %s182 = sphi 0, %s184
      %s185 = sphi 0, %s182
      %s186 = sphi 0, %s185
      %s202 = sphi 0, %s186
    $region4: #{graphsage_forward.3} parent=1 // loop_header_branch
      %15 = sbr.rel (%p13) target = $region8
    $region5: #{graphsage_forward.3} parent=1 // loop_body
      %s17 = ssub.s32 %s12, 1
      %s18 = ssub.s32 %s12, 2
      %s25 = sadd.s32 1, %s20
      %p26 = scmp.ge.s32.totalorder %s25, 2
      %s27 = scalar_select %p26, 0, %s25
      %s28 = sadd.s32 1, %s19
      %s29 = scalar_select %p26, %s28, %s19
      %p30 = scmp.ge.s32.totalorder %s29, 4
      %s31 = scalar_select %p30, 0, %s29
      %s32 = ssub.s32 %s19, %s31
      %s33 = ssub.s32 %s20, %s27
      %s34 = sor.u32 %s32, %s33
      %p35 = scmp.eq.s32.totalorder %s34, 0
      %s37 = sadd.s32 %s36, 1
      %s38 = scalar_select %p35, %s36, %s37
      %p41 = pneg %p35
      %p42 = scmp.eq.s32.totalorder %s12, 7
      %p43 = por %p41, %p42
      %p44 = scmp.ne.s32.totalorder %s36, %s39
      %p45 = scmp.eq.s32.totalorder %s12, 0
      %p46 = por %p44, %p45
      %p47 = scmp.ne.s32.totalorder %s36, %s39
      %p48 = scmp.eq.s32.totalorder %s17, 7
      %p49 = por %p47, %p48
      %p50 = scmp.ne.s32.totalorder %s39, %s40
      %p51 = scmp.eq.s32.totalorder %s17, 0
      %p52 = por %p50, %p51
      %p53 = scmp.ne.s32.totalorder %s39, %s40
      %p54 = scmp.eq.s32.totalorder %s18, 7
      %p55 = por %p53, %p54
      %p57 = scmp.ne.s32.totalorder %s40, %s56
      %p58 = scmp.eq.s32.totalorder %s18, 0
      %p59 = por %p57, %p58
      %s60 = ssub.s32 %s20, %s27
      %p61 = scmp.eq.s32.totalorder %s60, 0
      %s63 = sadd.s32 %s62, 1
      %s64 = scalar_select %p61, %s62, %s63
      %p67 = pneg %p61
      %p68 = scmp.eq.s32.totalorder %s12, 7
      %p69 = por %p67, %p68
      %p70 = scmp.ne.s32.totalorder %s62, %s65
      %p71 = scmp.eq.s32.totalorder %s12, 0
      %p72 = por %p70, %p71
      %p73 = scmp.ne.s32.totalorder %s62, %s65
      %p74 = scmp.eq.s32.totalorder %s17, 7
      %p75 = por %p73, %p74
      %p76 = scmp.ne.s32.totalorder %s65, %s66
      %p77 = scmp.eq.s32.totalorder %s17, 0
      %p78 = por %p76, %p77
      %p79 = scmp.ne.s32.totalorder %s65, %s66
      %p80 = scmp.eq.s32.totalorder %s18, 7
      %p81 = por %p79, %p80
      %p83 = scmp.ne.s32.totalorder %s66, %s82
      %p84 = scmp.eq.s32.totalorder %s18, 0
      %p85 = por %p83, %p84
      %s86 = ssub.s32 %s19, %s31
      %p87 = scmp.eq.s32.totalorder %s86, 0
      %s89 = sadd.s32 %s88, 1
      %s90 = scalar_select %p87, %s88, %s89
      %p93 = pneg %p87
      %p94 = scmp.eq.s32.totalorder %s12, 7
      %p95 = por %p93, %p94
      %p96 = scmp.ne.s32.totalorder %s88, %s91
      %p97 = scmp.eq.s32.totalorder %s12, 0
      %p98 = por %p96, %p97
      %p99 = scmp.ne.s32.totalorder %s88, %s91
      %p100 = scmp.eq.s32.totalorder %s17, 7
      %p101 = por %p99, %p100
      %p102 = scmp.ne.s32.totalorder %s91, %s92
      %p103 = scmp.eq.s32.totalorder %s17, 0
      %p104 = por %p102, %p103
      %p105 = scmp.ne.s32.totalorder %s91, %s92
      %p106 = scmp.eq.s32.totalorder %s18, 7
      %p107 = por %p105, %p106
      %p109 = scmp.ne.s32.totalorder %s92, %s108
      %p110 = scmp.eq.s32.totalorder %s18, 0
      %p111 = por %p109, %p110
      %s112 = ssub.s32 %s19, %s31
      %p113 = scmp.eq.s32.totalorder %s112, 0
      %s115 = sadd.s32 %s114, 1
      %s116 = scalar_select %p113, %s114, %s115
      %p119 = pneg %p113
      %p120 = scmp.eq.s32.totalorder %s12, 7
      %p121 = por %p119, %p120
      %p122 = scmp.ne.s32.totalorder %s114, %s117
      %p123 = scmp.eq.s32.totalorder %s12, 0
      %p124 = por %p122, %p123
      %p125 = scmp.ne.s32.totalorder %s114, %s117
      %p126 = scmp.eq.s32.totalorder %s17, 7
      %p127 = por %p125, %p126
      %p128 = scmp.ne.s32.totalorder %s117, %s118
      %p129 = scmp.eq.s32.totalorder %s17, 0
      %p130 = por %p128, %p129
      %p131 = scmp.ne.s32.totalorder %s117, %s118
      %p132 = scmp.eq.s32.totalorder %s18, 7
      %p133 = por %p131, %p132
      %p135 = scmp.ne.s32.totalorder %s118, %s134
      %p136 = scmp.eq.s32.totalorder %s18, 0
      %p137 = por %p135, %p136
      %s139 = sadd.s32 %s138, 1
      %p142 = scmp.eq.s32.totalorder %s12, 7
      %p143 = scmp.ne.s32.totalorder %s138, %s140
      %p144 = scmp.eq.s32.totalorder %s12, 0
      %p145 = por %p143, %p144
      %p146 = scmp.ne.s32.totalorder %s138, %s140
      %p147 = scmp.eq.s32.totalorder %s17, 7
      %p148 = por %p146, %p147
      %p149 = scmp.ne.s32.totalorder %s140, %s141
      %p150 = scmp.eq.s32.totalorder %s17, 0
      %p151 = por %p149, %p150
      %p152 = scmp.ne.s32.totalorder %s140, %s141
      %p153 = scmp.eq.s32.totalorder %s18, 7
      %p154 = por %p152, %p153
      %p156 = scmp.ne.s32.totalorder %s141, %s155
      %p157 = scmp.eq.s32.totalorder %s18, 0
      %p158 = por %p156, %p157
      %s160 = sadd.s32 %s159, 1
      %p163 = scmp.eq.s32.totalorder %s12, 7
      %p164 = scmp.ne.s32.totalorder %s159, %s161
      %p165 = scmp.eq.s32.totalorder %s12, 0
      %p166 = por %p164, %p165
      %p167 = scmp.ne.s32.totalorder %s159, %s161
      %p168 = scmp.eq.s32.totalorder %s17, 7
      %p169 = por %p167, %p168
      %p170 = scmp.ne.s32.totalorder %s161, %s162
      %p171 = scmp.eq.s32.totalorder %s17, 0
      %p172 = por %p170, %p171
      %p173 = scmp.ne.s32.totalorder %s161, %s162
      %p174 = scmp.eq.s32.totalorder %s18, 7
      %p175 = por %p173, %p174
      %p177 = scmp.ne.s32.totalorder %s162, %s176
      %p178 = scmp.eq.s32.totalorder %s18, 0
      %p179 = por %p177, %p178
      %s180 = ssub.s32 %s19, %s31
      %p181 = scmp.eq.s32.totalorder %s180, 0
      %s183 = sadd.s32 %s182, 1
      %s184 = scalar_select %p181, %s182, %s183
      %p187 = pneg %p181
      %p188 = scmp.eq.s32.totalorder %s12, 7
      %p189 = por %p187, %p188
      %p190 = scmp.ne.s32.totalorder %s182, %s185
      %p191 = scmp.eq.s32.totalorder %s12, 0
      %p192 = por %p190, %p191
      %p193 = scmp.ne.s32.totalorder %s182, %s185
      %p194 = scmp.eq.s32.totalorder %s17, 7
      %p195 = por %p193, %p194
      %p196 = scmp.ne.s32.totalorder %s185, %s186
      %p197 = scmp.eq.s32.totalorder %s17, 0
      %p198 = por %p196, %p197
      %p199 = scmp.ne.s32.totalorder %s185, %s186
      %p200 = scmp.eq.s32.totalorder %s18, 7
      %p201 = por %p199, %p200
      %p203 = scmp.ne.s32.totalorder %s186, %s202
      %p204 = scmp.eq.s32.totalorder %s18, 0
      %p205 = por %p203, %p204
      %p206 = scmp.le.s32.totalorder 1, %s12
      %p207 = scmp.lt.s32.totalorder %s12, 9
      %p208 = pnand %p206, %p207
      %p209 = pneg %p208
      // Predicated region
      $region9: #{graphsage_forward.3} parent=5 // pred_check
        _
      $region10: #{graphsage_forward.3} parent=5 // pred_check_branch
        %211 = sbr.rel (%p208) target = $region12
      $region11: #{graphsage_forward.3} parent=5 // pred_region
        %s212 = ssub.s32 %s12, 1
        // Predicated region
        $region13: #{graphsage_forward.3} parent=11 // pred_check
          %p213 = pneg %p151
        $region14: #{graphsage_forward.3} parent=11 // pred_check_branch
          %215 = sbr.rel (%p213) target = $region16
        $region15: #{graphsage_forward.3} parent=11 // pred_region
          _
        $region16: #{graphsage_forward.3} parent=11 // pred_fallthru
          _
        // Predicated region
        $region17: #{graphsage_forward.3} parent=11 // pred_check
          %p216 = pneg %p172
        $region18: #{graphsage_forward.3} parent=11 // pred_check_branch
          %218 = sbr.rel (%p216) target = $region20
        $region19: #{graphsage_forward.3} parent=11 // pred_region
          _
        $region20: #{graphsage_forward.3} parent=11 // pred_fallthru
          _
      $region12: #{graphsage_forward.3} parent=5 // pred_fallthru
        _
      %p219 = scmp.lt.s32.totalorder %s12, 8
      // Predicated region
      $region21: #{graphsage_forward.3} parent=5 // pred_check
        %p220 = pneg %p219
      $region22: #{graphsage_forward.3} parent=5 // pred_check_branch
        %222 = sbr.rel (%p220) target = $region24
      $region23: #{graphsage_forward.3} parent=5 // pred_region
        // Predicated region
        $region25: #{graphsage_forward.3} parent=23 // pred_check
          %p223 = pneg %p46
        $region26: #{graphsage_forward.3} parent=23 // pred_check_branch
          %225 = sbr.rel (%p223) target = $region28
        $region27: #{graphsage_forward.3} parent=23 // pred_region
          %s226 = sand.u32 %s36, 1
          %s227 = sand.u32 %s36, 1
          %s228 = smul.addr %s227, 128
          %s229 = scalar_lea.vmem [#allocation3], %s228
          %s230 = smul.u32 16, %s19
          %s231 = smul.u32 2, %s20
          %s232 = smul.addr %s230, 4
          %s233 = sadd.s32 %s231, %s232
          %s234 = smul.addr %s233, 4
          %s235 = scalar_lea.vmem %s0, %s234
          // Predicated region
          $region29: #{graphsage_forward.3} parent=27 // pred_check
            _
          $region30: #{graphsage_forward.3} parent=27 // pred_check_branch
            %237 = sbr.rel (0) target = $region32
          $region31: #{graphsage_forward.3} parent=27 // pred_region
            // Predicated region
            $region33: #{graphsage_forward.3} parent=31 // pred_check
              _
            $region34: #{graphsage_forward.3} parent=31 // pred_check_branch
              %239 = sbr.rel (0) target = $region36
            $region35: #{graphsage_forward.3} parent=31 // pred_region
              // Predicated region
              $region48: #{graphsage_forward.3} parent=35 // pred_check
                _
              $region49: #{graphsage_forward.3} parent=35 // pred_check_branch
                %285 = sbr.rel (0) target = $region51
              $region50: #{graphsage_forward.3} parent=35 // pred_region
                loop: start=0, step=1, limit=1
                $region52: #{graphsage_forward.3} parent=50 // loop_pre_header
                  _
                $region53: #{graphsage_forward.3} parent=50 // loop_header
                  %s287 = sphi 0, %s291
                  %p288 = scmp.ge.s32.totalorder %s287, 1
                  %s292 = sphi %s235, %s235
                  %s293 = sphi %s229, %s229
                $region54: #{graphsage_forward.3} parent=50 // loop_header_branch
                  %290 = sbr.rel (%p288) target = $region58
                $region55: #{graphsage_forward.3} parent=50 // loop_body
                  %v294 = vld [vmem:[%s292] sm:$0xff]
                  %295 = vst [vmem:[%s293] sm:$0xff] %v294
                  %v296 = vld [vmem:[%s292 + $0x10] sm:$0xff]
                  %297 = vst [vmem:[%s293 + $0x8] sm:$0xff] %v296
                  %v298 = vld [vmem:[%s292 + $0x20] sm:$0xff]
                  %299 = vst [vmem:[%s293 + $0x10] sm:$0xff] %v298
                  %v300 = vld [vmem:[%s292 + $0x30] sm:$0xff]
                  %301 = vst [vmem:[%s293 + $0x18] sm:$0xff] %v300
                  %v302 = vld [vmem:[%s292 + $0x40] sm:$0xff]
                  %303 = vst [vmem:[%s293 + $0x20] sm:$0xff] %v302
                  %v304 = vld [vmem:[%s292 + $0x50] sm:$0xff]
                  %305 = vst [vmem:[%s293 + $0x28] sm:$0xff] %v304
                  %v306 = vld [vmem:[%s292 + $0x60] sm:$0xff]
                  %307 = vst [vmem:[%s293 + $0x30] sm:$0xff] %v306
                  %v308 = vld [vmem:[%s292 + $0x70] sm:$0xff]
                  %309 = vst [vmem:[%s293 + $0x38] sm:$0xff] %v308
                  %v310 = vld [vmem:[%s292 + $0x80] sm:$0xff]
                  %311 = vst [vmem:[%s293 + $0x40] sm:$0xff] %v310
                  %v312 = vld [vmem:[%s292 + $0x90] sm:$0xff]
                  %313 = vst [vmem:[%s293 + $0x48] sm:$0xff] %v312
                  %v314 = vld [vmem:[%s292 + $0xa0] sm:$0xff]
                  %315 = vst [vmem:[%s293 + $0x50] sm:$0xff] %v314
                  %v316 = vld [vmem:[%s292 + $0xb0] sm:$0xff]
                  %317 = vst [vmem:[%s293 + $0x58] sm:$0xff] %v316
                  %v318 = vld [vmem:[%s292 + $0xc0] sm:$0xff]
                  %319 = vst [vmem:[%s293 + $0x60] sm:$0xff] %v318
                  %v320 = vld [vmem:[%s292 + $0xd0] sm:$0xff]
                  %321 = vst [vmem:[%s293 + $0x68] sm:$0xff] %v320
                  %v322 = vld [vmem:[%s292 + $0xe0] sm:$0xff]
                  %323 = vst [vmem:[%s293 + $0x70] sm:$0xff] %v322
                  %v324 = vld [vmem:[%s292 + $0xf0] sm:$0xff]
                  %325 = vst [vmem:[%s293 + $0x78] sm:$0xff] %v324
                $region56: #{graphsage_forward.3} parent=50 // loop_footer
                  %s291 = sadd.s32 1, %s287
                $region57: #{graphsage_forward.3} parent=50 // loop_footer_branch
                  %286 = sbr.rel target = $region53
                $region58: #{graphsage_forward.3} parent=50 // loop_exit
                  _
              $region51: #{graphsage_forward.3} parent=35 // pred_fallthru
                _
              // Predicated region
              $region59: #{graphsage_forward.3} parent=35 // pred_check
                _
              $region60: #{graphsage_forward.3} parent=35 // pred_check_branch
                %327 = sbr.rel target = $region62
              $region61: #{graphsage_forward.3} parent=35 // pred_region
                _
              $region62: #{graphsage_forward.3} parent=35 // pred_fallthru
                _
            $region36: #{graphsage_forward.3} parent=31 // pred_fallthru
              _
            // Predicated region
            $region37: #{graphsage_forward.3} parent=31 // pred_check
              _
            $region38: #{graphsage_forward.3} parent=31 // pred_check_branch
              %241 = sbr.rel target = $region40
            $region39: #{graphsage_forward.3} parent=31 // pred_region
              %s243 = ssub.s32 256, 1
              loop: start=0, step=1, limit=1
              $region41: #{graphsage_forward.3} parent=39 // loop_pre_header
                _
              $region42: #{graphsage_forward.3} parent=39 // loop_header
                %s245 = sphi 0, %s249
                %p246 = scmp.ge.s32.totalorder %s245, 1
                %s250 = sphi %s235, %s235
                %s251 = sphi %s229, %s229
              $region43: #{graphsage_forward.3} parent=39 // loop_header_branch
                %248 = sbr.rel (%p246) target = $region47
              $region44: #{graphsage_forward.3} parent=39 // loop_body
                %v252 = vld [vmem:[%s250] sm:%s243]
                %253 = vst [vmem:[%s251] sm:%s243] %v252
                %v254 = vld [vmem:[%s250 + $0x10] sm:%s243]
                %255 = vst [vmem:[%s251 + $0x8] sm:%s243] %v254
                %v256 = vld [vmem:[%s250 + $0x20] sm:%s243]
                %257 = vst [vmem:[%s251 + $0x10] sm:%s243] %v256
                %v258 = vld [vmem:[%s250 + $0x30] sm:%s243]
                %259 = vst [vmem:[%s251 + $0x18] sm:%s243] %v258
                %v260 = vld [vmem:[%s250 + $0x40] sm:%s243]
                %261 = vst [vmem:[%s251 + $0x20] sm:%s243] %v260
                %v262 = vld [vmem:[%s250 + $0x50] sm:%s243]
                %263 = vst [vmem:[%s251 + $0x28] sm:%s243] %v262
                %v264 = vld [vmem:[%s250 + $0x60] sm:%s243]
                %265 = vst [vmem:[%s251 + $0x30] sm:%s243] %v264
                %v266 = vld [vmem:[%s250 + $0x70] sm:%s243]
                %267 = vst [vmem:[%s251 + $0x38] sm:%s243] %v266
                %v268 = vld [vmem:[%s250 + $0x80] sm:%s243]
                %269 = vst [vmem:[%s251 + $0x40] sm:%s243] %v268
                %v270 = vld [vmem:[%s250 + $0x90] sm:%s243]
                %271 = vst [vmem:[%s251 + $0x48] sm:%s243] %v270
                %v272 = vld [vmem:[%s250 + $0xa0] sm:%s243]
                %273 = vst [vmem:[%s251 + $0x50] sm:%s243] %v272
                %v274 = vld [vmem:[%s250 + $0xb0] sm:%s243]
                %275 = vst [vmem:[%s251 + $0x58] sm:%s243] %v274
                %v276 = vld [vmem:[%s250 + $0xc0] sm:%s243]
                %277 = vst [vmem:[%s251 + $0x60] sm:%s243] %v276
                %v278 = vld [vmem:[%s250 + $0xd0] sm:%s243]
                %279 = vst [vmem:[%s251 + $0x68] sm:%s243] %v278
                %v280 = vld [vmem:[%s250 + $0xe0] sm:%s243]
                %281 = vst [vmem:[%s251 + $0x70] sm:%s243] %v280
                %v282 = vld [vmem:[%s250 + $0xf0] sm:%s243]
                %283 = vst [vmem:[%s251 + $0x78] sm:%s243] %v282
              $region45: #{graphsage_forward.3} parent=39 // loop_footer
                %s249 = sadd.s32 1, %s245
              $region46: #{graphsage_forward.3} parent=39 // loop_footer_branch
                %244 = sbr.rel target = $region42
              $region47: #{graphsage_forward.3} parent=39 // loop_exit
                _
            $region40: #{graphsage_forward.3} parent=31 // pred_fallthru
              _
          $region32: #{graphsage_forward.3} parent=27 // pred_fallthru
            _
          %328 = vnop
        $region28: #{graphsage_forward.3} parent=23 // pred_fallthru
          _
        // Predicated region
        $region63: #{graphsage_forward.3} parent=23 // pred_check
          %p329 = pneg %p72
        $region64: #{graphsage_forward.3} parent=23 // pred_check_branch
          %331 = sbr.rel (%p329) target = $region66
        $region65: #{graphsage_forward.3} parent=23 // pred_region
          %s332 = smul.u32 32, %s20
          %p333 = scmp.lt.s32.totalorder %s332, 63
          %s334 = scalar_select %p333, %s332, 63
          %s335 = smul.addr %s334, 8
          %s336 = scalar_lea.vmem %s1, %s335
          %s337 = smul.u32 32, %s20
        $region66: #{graphsage_forward.3} parent=23 // pred_fallthru
          _
        // Predicated region
        $region67: #{graphsage_forward.3} parent=23 // pred_check
          %p338 = pneg %p98
        $region68: #{graphsage_forward.3} parent=23 // pred_check_branch
          %340 = sbr.rel (%p338) target = $region70
        $region69: #{graphsage_forward.3} parent=23 // pred_region
          %s341 = smul.u32 16, %s19
          %p342 = scmp.lt.s32.totalorder %s341, 63
          %s343 = scalar_select %p342, %s341, 63
          %s344 = smul.addr %s343, 8
          %s345 = scalar_lea.vmem %s2, %s344
          %s346 = smul.u32 16, %s19
        $region70: #{graphsage_forward.3} parent=23 // pred_fallthru
          _
        // Predicated region
        $region71: #{graphsage_forward.3} parent=23 // pred_check
          %p347 = pneg %p124
        $region72: #{graphsage_forward.3} parent=23 // pred_check_branch
          %349 = sbr.rel (%p347) target = $region74
        $region73: #{graphsage_forward.3} parent=23 // pred_region
          %s350 = smul.u32 16, %s19
          %p351 = scmp.lt.s32.totalorder %s350, 63
          %s352 = scalar_select %p351, %s350, 63
          %s353 = smul.addr %s352, 8
          %s354 = scalar_lea.vmem %s3, %s353
          %s355 = smul.u32 16, %s19
        $region74: #{graphsage_forward.3} parent=23 // pred_fallthru
          _
      $region24: #{graphsage_forward.3} parent=5 // pred_fallthru
        _
      %p356 = scmp.le.s32.totalorder 1, %s12
      %p357 = scmp.lt.s32.totalorder %s12, 9
      %p358 = pnand %p356, %p357
      %p359 = pneg %p358
      // Predicated region
      $region75: #{graphsage_forward.3} parent=5 // pred_check
        _
      $region76: #{graphsage_forward.3} parent=5 // pred_check_branch
        %361 = sbr.rel (%p358) target = $region78
      $region77: #{graphsage_forward.3} parent=5 // pred_region
        %s362 = ssub.s32 %s12, 1
        %s363 = sand.u32 %s39, 1
        %s364 = sand.u32 %s39, 1
        %s365 = smul.addr %s364, 128
        %s366 = scalar_lea.vmem [#allocation3], %s365
        // Predicated region
        $region79: #{graphsage_forward.3} parent=77 // pred_check
          %p367 = pneg %p52
        $region80: #{graphsage_forward.3} parent=77 // pred_check_branch
          %369 = sbr.rel (%p367) target = $region82
        $region81: #{graphsage_forward.3} parent=77 // pred_region
          _
        $region82: #{graphsage_forward.3} parent=77 // pred_fallthru
          _
        %s370 = sand.u32 %s39, 1
        %s371 = sand.u32 %s39, 1
        %s372 = smul.addr %s371, 128
        %s373 = scalar_lea.vmem [#allocation3], %s372
        %p374 = pneg %p52
        %p375 = pneg %p49
        %s376 = smul.u32 32, %s22
        %p377 = scmp.lt.s32.totalorder %s376, 63
        %s378 = scalar_select %p377, %s376, 63
        %s379 = smul.addr %s378, 8
        %s380 = scalar_lea.vmem %s1, %s379
        %p381 = pneg %p78
        %p382 = pneg %p75
        %s383 = smul.u32 16, %s21
        %p384 = scmp.lt.s32.totalorder %s383, 63
        %s385 = scalar_select %p384, %s383, 63
        %s386 = smul.addr %s385, 8
        %s387 = scalar_lea.vmem %s2, %s386
        %p388 = pneg %p104
        %p389 = pneg %p101
        %s390 = smul.u32 16, %s21
        %p391 = scmp.lt.s32.totalorder %s390, 63
        %s392 = scalar_select %p391, %s390, 63
        %s393 = smul.addr %s392, 8
        %s394 = scalar_lea.vmem %s3, %s393
        %p395 = pneg %p130
        %p396 = pneg %p127
        %p397 = pneg %p151
        %p398 = pneg %p148
        %p399 = pneg %p172
        %p400 = pneg %p169
        %p401 = pneg %p198
        %p402 = pneg %p195
        %s403 = smul.u32 16, %s21
        %p404 = scmp.lt.s32.totalorder %s403, 63
        %s405 = scalar_select %p404, %s403, 63
        %s406 = smul.addr %s405, 8
        %s407 = scalar_lea.vmem %s6, %s406
        %s408 = smul.u32 16, %s21
        %s409 = smul.u32 2, %s22
        %s410 = smul.u32 32, %s22
        %p411 = scmp.lt.s32.totalorder %s410, 63
        %s412 = scalar_select %p411, %s410, 63
        %s413 = smul.addr %s412, 8
        %s414 = scalar_lea.vmem %s1, %s413
        %s415 = smul.u32 32, %s22
        %s416 = smul.u32 16, %s21
        %p417 = scmp.lt.s32.totalorder %s416, 63
        %s418 = scalar_select %p417, %s416, 63
        %s419 = smul.addr %s418, 8
        %s420 = scalar_lea.vmem %s2, %s419
        %s421 = smul.u32 16, %s21
        %s422 = smul.u32 16, %s21
        %p423 = scmp.lt.s32.totalorder %s422, 63
        %s424 = scalar_select %p423, %s422, 63
        %s425 = smul.addr %s424, 8
        %s426 = scalar_lea.vmem %s3, %s425
        %s427 = smul.u32 16, %s21
        %s428 = smul.u32 16, %s21
        %p429 = scmp.lt.s32.totalorder %s428, 63
        %s430 = scalar_select %p429, %s428, 63
        %s431 = smul.addr %s430, 8
        %s432 = scalar_lea.vmem %s6, %s431
        %s433 = smul.u32 16, %s21
        %p434 = scmp.eq.s32.totalorder %s22, 0
        // Predicated region
        $region83: #{graphsage_forward.3} parent=77 // pred_check
          %p435 = pneg %p434
        $region84: #{graphsage_forward.3} parent=77 // pred_check_branch
          %437 = sbr.rel (%p435) target = $region86
        $region85: #{graphsage_forward.3} parent=77 // pred_region
          %438 = vst [vmem:[#allocation2] sm:$0xff] 0.0
          %439 = vst [vmem:[#allocation2 + $0x8] sm:$0xff] 0.0
          %440 = vst [vmem:[#allocation2 + $0x10] sm:$0xff] 0.0
          %441 = vst [vmem:[#allocation2 + $0x18] sm:$0xff] 0.0
          %442 = vst [vmem:[#allocation2 + $0x20] sm:$0xff] 0.0
          %443 = vst [vmem:[#allocation2 + $0x28] sm:$0xff] 0.0
          %444 = vst [vmem:[#allocation2 + $0x30] sm:$0xff] 0.0
          %445 = vst [vmem:[#allocation2 + $0x38] sm:$0xff] 0.0
          %446 = vst [vmem:[#allocation2 + $0x40] sm:$0xff] 0.0
          %447 = vst [vmem:[#allocation2 + $0x48] sm:$0xff] 0.0
          %448 = vst [vmem:[#allocation2 + $0x50] sm:$0xff] 0.0
          %449 = vst [vmem:[#allocation2 + $0x58] sm:$0xff] 0.0
          %450 = vst [vmem:[#allocation2 + $0x60] sm:$0xff] 0.0
          %451 = vst [vmem:[#allocation2 + $0x68] sm:$0xff] 0.0
          %452 = vst [vmem:[#allocation2 + $0x70] sm:$0xff] 0.0
          %453 = vst [vmem:[#allocation2 + $0x78] sm:$0xff] 0.0
        $region86: #{graphsage_forward.3} parent=77 // pred_fallthru
          _
        %v454 = vld [vmem:[#allocation2] sm:$0xff]
        %v455 = vld [vmem:[#allocation2 + $0x8] sm:$0xff]
        %v456 = vld [vmem:[#allocation2 + $0x10] sm:$0xff]
        %v457 = vld [vmem:[#allocation2 + $0x18] sm:$0xff]
        %v458 = vld [vmem:[#allocation2 + $0x20] sm:$0xff]
        %v459 = vld [vmem:[#allocation2 + $0x28] sm:$0xff]
        %v460 = vld [vmem:[#allocation2 + $0x30] sm:$0xff]
        %v461 = vld [vmem:[#allocation2 + $0x38] sm:$0xff]
        %v462 = vld [vmem:[#allocation2 + $0x40] sm:$0xff]
        %v463 = vld [vmem:[#allocation2 + $0x48] sm:$0xff]
        %v464 = vld [vmem:[#allocation2 + $0x50] sm:$0xff]
        %v465 = vld [vmem:[#allocation2 + $0x58] sm:$0xff]
        %v466 = vld [vmem:[#allocation2 + $0x60] sm:$0xff]
        %v467 = vld [vmem:[#allocation2 + $0x68] sm:$0xff]
        %v468 = vld [vmem:[#allocation2 + $0x70] sm:$0xff]
        %v469 = vld [vmem:[#allocation2 + $0x78] sm:$0xff]
        %v470 = vld [vmem:[%s366] sm:$0xff]
        %v471 = vld [vmem:[%s366 + $0x8] sm:$0xff]
        %v472 = vld [vmem:[%s366 + $0x10] sm:$0xff]
        %v473 = vld [vmem:[%s366 + $0x18] sm:$0xff]
        %v474 = vld [vmem:[%s366 + $0x20] sm:$0xff]
        %v475 = vld [vmem:[%s366 + $0x28] sm:$0xff]
        %v476 = vld [vmem:[%s366 + $0x30] sm:$0xff]
        %v477 = vld [vmem:[%s366 + $0x38] sm:$0xff]
        %v478 = vld [vmem:[%s366 + $0x40] sm:$0xff]
        %v479 = vld [vmem:[%s366 + $0x48] sm:$0xff]
        %v480 = vld [vmem:[%s366 + $0x50] sm:$0xff]
        %v481 = vld [vmem:[%s366 + $0x58] sm:$0xff]
        %v482 = vld [vmem:[%s366 + $0x60] sm:$0xff]
        %v483 = vld [vmem:[%s366 + $0x68] sm:$0xff]
        %v484 = vld [vmem:[%s366 + $0x70] sm:$0xff]
        %v485 = vld [vmem:[%s366 + $0x78] sm:$0xff]
        %v486 = vld [vmem:[%s414] sm:$0xff]
        %v487 = vld [vmem:[%s414 + $0x8] sm:$0xff]
        %v488 = vld [vmem:[%s414 + $0x10] sm:$0xff]
        %v489 = vld [vmem:[%s414 + $0x18] sm:$0xff]
        %v490 = vld [vmem:[%s414 + $0x20] sm:$0xff]
        %v491 = vld [vmem:[%s414 + $0x28] sm:$0xff]
        %v492 = vld [vmem:[%s414 + $0x30] sm:$0xff]
        %v493 = vld [vmem:[%s414 + $0x38] sm:$0xff]
        %v494 = vld [vmem:[%s414 + $0x40] sm:$0xff]
        %v495 = vld [vmem:[%s414 + $0x48] sm:$0xff]
        %v496 = vld [vmem:[%s414 + $0x50] sm:$0xff]
        %v497 = vld [vmem:[%s414 + $0x58] sm:$0xff]
        %v498 = vld [vmem:[%s414 + $0x60] sm:$0xff]
        %v499 = vld [vmem:[%s414 + $0x68] sm:$0xff]
        %v500 = vld [vmem:[%s414 + $0x70] sm:$0xff]
        %v501 = vld [vmem:[%s414 + $0x78] sm:$0xff]
        %v502 = vld [vmem:[%s414 + $0x80] sm:$0xff]
        %v503 = vld [vmem:[%s414 + $0x88] sm:$0xff]
        %v504 = vld [vmem:[%s414 + $0x90] sm:$0xff]
        %v505 = vld [vmem:[%s414 + $0x98] sm:$0xff]
        %v506 = vld [vmem:[%s414 + $0xa0] sm:$0xff]
        %v507 = vld [vmem:[%s414 + $0xa8] sm:$0xff]
        %v508 = vld [vmem:[%s414 + $0xb0] sm:$0xff]
        %v509 = vld [vmem:[%s414 + $0xb8] sm:$0xff]
        %v510 = vld [vmem:[%s414 + $0xc0] sm:$0xff]
        %v511 = vld [vmem:[%s414 + $0xc8] sm:$0xff]
        %v512 = vld [vmem:[%s414 + $0xd0] sm:$0xff]
        %v513 = vld [vmem:[%s414 + $0xd8] sm:$0xff]
        %v514 = vld [vmem:[%s414 + $0xe0] sm:$0xff]
        %v515 = vld [vmem:[%s414 + $0xe8] sm:$0xff]
        %v516 = vld [vmem:[%s414 + $0xf0] sm:$0xff]
        %v517 = vld [vmem:[%s414 + $0xf8] sm:$0xff]
        %v518 = vpack.c.bf16 %v487, %v486
        %v519 = vpack.c.bf16 %v489, %v488
        %v520 = vpack.c.bf16 %v491, %v490
        %v521 = vpack.c.bf16 %v493, %v492
        %v522 = vpack.c.bf16 %v495, %v494
        %v523 = vpack.c.bf16 %v497, %v496
        %v524 = vpack.c.bf16 %v499, %v498
        %v525 = vpack.c.bf16 %v501, %v500
        %v526 = vpack.c.bf16 %v503, %v502
        %v527 = vpack.c.bf16 %v505, %v504
        %v528 = vpack.c.bf16 %v507, %v506
        %v529 = vpack.c.bf16 %v509, %v508
        %v530 = vpack.c.bf16 %v511, %v510
        %v531 = vpack.c.bf16 %v513, %v512
        %v532 = vpack.c.bf16 %v515, %v514
        %v533 = vpack.c.bf16 %v517, %v516
        %v550 = vunpack.c.l.b16 %v470
        %v551 = vunpack.c.h.b16 %v470
        %v552 = vunpack.c.l.b16 %v471
        %v553 = vunpack.c.h.b16 %v471
        %v554 = vunpack.c.l.b16 %v472
        %v555 = vunpack.c.h.b16 %v472
        %v556 = vunpack.c.l.b16 %v473
        %v557 = vunpack.c.h.b16 %v473
        %v558 = vunpack.c.l.b16 %v474
        %v559 = vunpack.c.h.b16 %v474
        %v560 = vunpack.c.l.b16 %v475
        %v561 = vunpack.c.h.b16 %v475
        %v562 = vunpack.c.l.b16 %v476
        %v563 = vunpack.c.h.b16 %v476
        %v564 = vunpack.c.l.b16 %v477
        %v565 = vunpack.c.h.b16 %v477
        %v566 = vunpack.c.l.b16 %v478
        %v567 = vunpack.c.h.b16 %v478
        %v568 = vunpack.c.l.b16 %v479
        %v569 = vunpack.c.h.b16 %v479
        %v570 = vunpack.c.l.b16 %v480
        %v571 = vunpack.c.h.b16 %v480
        %v572 = vunpack.c.l.b16 %v481
        %v573 = vunpack.c.h.b16 %v481
        %v574 = vunpack.c.l.b16 %v482
        %v575 = vunpack.c.h.b16 %v482
        %v576 = vunpack.c.l.b16 %v483
        %v577 = vunpack.c.h.b16 %v483
        %v578 = vunpack.c.l.b16 %v484
        %v579 = vunpack.c.h.b16 %v484
        %v580 = vunpack.c.l.b16 %v485
        %v581 = vunpack.c.h.b16 %v485
        %v582 = vpack.c.b16 %v552, %v550
        %v583 = vpack.c.b16 %v553, %v551
        %v584 = vpack.c.b16 %v556, %v554
        %v585 = vpack.c.b16 %v557, %v555
        %v586 = vpack.c.b16 %v560, %v558
        %v587 = vpack.c.b16 %v561, %v559
        %v588 = vpack.c.b16 %v564, %v562
        %v589 = vpack.c.b16 %v565, %v563
        %v590 = vpack.c.b16 %v568, %v566
        %v591 = vpack.c.b16 %v569, %v567
        %v592 = vpack.c.b16 %v572, %v570
        %v593 = vpack.c.b16 %v573, %v571
        %v594 = vpack.c.b16 %v576, %v574
        %v595 = vpack.c.b16 %v577, %v575
        %v596 = vpack.c.b16 %v580, %v578
        %v597 = vpack.c.b16 %v581, %v579
        %614 = vmatpush.bf16.msra.mxu0 %v525
        %615 = vmatpush.bf16.msra.mxu0 %v524
        %616 = vmatpush.bf16.msra.mxu0 %v523
        %617 = vmatpush.bf16.msra.mxu0 %v522
        %618 = vmatpush.bf16.msra.mxu0 %v521
        %619 = vmatpush.bf16.msra.mxu0 %v520
        %620 = vmatpush.bf16.msra.mxu0 %v519
        %621 = vmatpush.bf16.msra.mxu0 %v518
        %622 = vmatmul.bf16.gmra.mxu0 %v582
        %v623 = vpop.f32.mrf.mxu0
        %v624 = vadd.f32 0.0, %v623
        %v625 = vpop.f32.mrf.mxu0
        %v626 = vadd.f32 0.0, %v625
        %627 = vmatmul.bf16.gmra.mxu0 %v584
        %v628 = vpop.f32.mrf.mxu0
        %v629 = vadd.f32 0.0, %v628
        %v630 = vpop.f32.mrf.mxu0
        %v631 = vadd.f32 0.0, %v630
        %632 = vmatmul.bf16.gmra.mxu0 %v586
        %v633 = vpop.f32.mrf.mxu0
        %v634 = vadd.f32 0.0, %v633
        %v635 = vpop.f32.mrf.mxu0
        %v636 = vadd.f32 0.0, %v635
        %637 = vmatmul.bf16.gmra.mxu0 %v588
        %v638 = vpop.f32.mrf.mxu0
        %v639 = vadd.f32 0.0, %v638
        %v640 = vpop.f32.mrf.mxu0
        %v641 = vadd.f32 0.0, %v640
        %642 = vmatmul.bf16.gmra.mxu0 %v590
        %v643 = vpop.f32.mrf.mxu0
        %v644 = vadd.f32 0.0, %v643
        %v645 = vpop.f32.mrf.mxu0
        %v646 = vadd.f32 0.0, %v645
        %647 = vmatmul.bf16.gmra.mxu0 %v592
        %v648 = vpop.f32.mrf.mxu0
        %v649 = vadd.f32 0.0, %v648
        %v650 = vpop.f32.mrf.mxu0
        %v651 = vadd.f32 0.0, %v650
        %652 = vmatmul.bf16.gmra.mxu0 %v594
        %v653 = vpop.f32.mrf.mxu0
        %v654 = vadd.f32 0.0, %v653
        %v655 = vpop.f32.mrf.mxu0
        %v656 = vadd.f32 0.0, %v655
        %657 = vmatmul.bf16.gmra.mxu0 %v596
        %v658 = vpop.f32.mrf.mxu0
        %v659 = vadd.f32 0.0, %v658
        %v660 = vpop.f32.mrf.mxu0
        %v661 = vadd.f32 0.0, %v660
        %662 = vdwg.mxu0
        %663 = vmatpush.bf16.msra.mxu0 %v533
        %664 = vmatpush.bf16.msra.mxu0 %v532
        %665 = vmatpush.bf16.msra.mxu0 %v531
        %666 = vmatpush.bf16.msra.mxu0 %v530
        %667 = vmatpush.bf16.msra.mxu0 %v529
        %668 = vmatpush.bf16.msra.mxu0 %v528
        %669 = vmatpush.bf16.msra.mxu0 %v527
        %670 = vmatpush.bf16.msra.mxu0 %v526
        %671 = vmatmul.bf16.gmra.mxu0 %v583
        %v672 = vpop.f32.mrf.mxu0
        %v673 = vadd.f32 %v624, %v672
        %v674 = vpop.f32.mrf.mxu0
        %v675 = vadd.f32 %v626, %v674
        %676 = vmatmul.bf16.gmra.mxu0 %v585
        %v677 = vpop.f32.mrf.mxu0
        %v678 = vadd.f32 %v629, %v677
        %v679 = vpop.f32.mrf.mxu0
        %v680 = vadd.f32 %v631, %v679
        %681 = vmatmul.bf16.gmra.mxu0 %v587
        %v682 = vpop.f32.mrf.mxu0
        %v683 = vadd.f32 %v634, %v682
        %v684 = vpop.f32.mrf.mxu0
        %v685 = vadd.f32 %v636, %v684
        %686 = vmatmul.bf16.gmra.mxu0 %v589
        %v687 = vpop.f32.mrf.mxu0
        %v688 = vadd.f32 %v639, %v687
        %v689 = vpop.f32.mrf.mxu0
        %v690 = vadd.f32 %v641, %v689
        %691 = vmatmul.bf16.gmra.mxu0 %v591
        %v692 = vpop.f32.mrf.mxu0
        %v693 = vadd.f32 %v644, %v692
        %v694 = vpop.f32.mrf.mxu0
        %v695 = vadd.f32 %v646, %v694
        %696 = vmatmul.bf16.gmra.mxu0 %v593
        %v697 = vpop.f32.mrf.mxu0
        %v698 = vadd.f32 %v649, %v697
        %v699 = vpop.f32.mrf.mxu0
        %v700 = vadd.f32 %v651, %v699
        %701 = vmatmul.bf16.gmra.mxu0 %v595
        %v702 = vpop.f32.mrf.mxu0
        %v703 = vadd.f32 %v654, %v702
        %v704 = vpop.f32.mrf.mxu0
        %v705 = vadd.f32 %v656, %v704
        %706 = vmatmul.bf16.gmra.mxu0 %v597
        %v707 = vpop.f32.mrf.mxu0
        %v708 = vadd.f32 %v659, %v707
        %v709 = vpop.f32.mrf.mxu0
        %v710 = vadd.f32 %v661, %v709
        %711 = vdwg.mxu0
        %v712 = vadd.f32 %v454, %v673
        %v713 = vadd.f32 %v455, %v675
        %v714 = vadd.f32 %v456, %v678
        %v715 = vadd.f32 %v457, %v680
        %v716 = vadd.f32 %v458, %v683
        %v717 = vadd.f32 %v459, %v685
        %v718 = vadd.f32 %v460, %v688
        %v719 = vadd.f32 %v461, %v690
        %v720 = vadd.f32 %v462, %v693
        %v721 = vadd.f32 %v463, %v695
        %v722 = vadd.f32 %v464, %v698
        %v723 = vadd.f32 %v465, %v700
        %v724 = vadd.f32 %v466, %v703
        %v725 = vadd.f32 %v467, %v705
        %v726 = vadd.f32 %v468, %v708
        %v727 = vadd.f32 %v469, %v710
        %728 = vst [vmem:[#allocation2] sm:$0xff] %v712
        %729 = vst [vmem:[#allocation2 + $0x8] sm:$0xff] %v713
        %730 = vst [vmem:[#allocation2 + $0x10] sm:$0xff] %v714
        %731 = vst [vmem:[#allocation2 + $0x18] sm:$0xff] %v715
        %732 = vst [vmem:[#allocation2 + $0x20] sm:$0xff] %v716
        %733 = vst [vmem:[#allocation2 + $0x28] sm:$0xff] %v717
        %734 = vst [vmem:[#allocation2 + $0x30] sm:$0xff] %v718
        %735 = vst [vmem:[#allocation2 + $0x38] sm:$0xff] %v719
        %736 = vst [vmem:[#allocation2 + $0x40] sm:$0xff] %v720
        %737 = vst [vmem:[#allocation2 + $0x48] sm:$0xff] %v721
        %738 = vst [vmem:[#allocation2 + $0x50] sm:$0xff] %v722
        %739 = vst [vmem:[#allocation2 + $0x58] sm:$0xff] %v723
        %740 = vst [vmem:[#allocation2 + $0x60] sm:$0xff] %v724
        %741 = vst [vmem:[#allocation2 + $0x68] sm:$0xff] %v725
        %742 = vst [vmem:[#allocation2 + $0x70] sm:$0xff] %v726
        %743 = vst [vmem:[#allocation2 + $0x78] sm:$0xff] %v727
        %p744 = scmp.eq.s32.totalorder %s22, 1
        // Predicated region
        $region87: #{graphsage_forward.3} parent=77 // pred_check
          %p745 = pneg %p744
        $region88: #{graphsage_forward.3} parent=77 // pred_check_branch
          %747 = sbr.rel (%p745) target = $region90
        $region89: #{graphsage_forward.3} parent=77 // pred_region
          %v748 = vld [vmem:[#allocation2] sm:$0xff]
          %v749 = vld [vmem:[#allocation2 + $0x8] sm:$0xff]
          %v750 = vld [vmem:[#allocation2 + $0x10] sm:$0xff]
          %v751 = vld [vmem:[#allocation2 + $0x18] sm:$0xff]
          %v752 = vld [vmem:[#allocation2 + $0x20] sm:$0xff]
          %v753 = vld [vmem:[#allocation2 + $0x28] sm:$0xff]
          %v754 = vld [vmem:[#allocation2 + $0x30] sm:$0xff]
          %v755 = vld [vmem:[#allocation2 + $0x38] sm:$0xff]
          %v756 = vld [vmem:[#allocation2 + $0x40] sm:$0xff]
          %v757 = vld [vmem:[#allocation2 + $0x48] sm:$0xff]
          %v758 = vld [vmem:[#allocation2 + $0x50] sm:$0xff]
          %v759 = vld [vmem:[#allocation2 + $0x58] sm:$0xff]
          %v760 = vld [vmem:[#allocation2 + $0x60] sm:$0xff]
          %v761 = vld [vmem:[#allocation2 + $0x68] sm:$0xff]
          %v762 = vld [vmem:[#allocation2 + $0x70] sm:$0xff]
          %v763 = vld [vmem:[#allocation2 + $0x78] sm:$0xff]
          %v764 = vld [vmem:[%s426] sm:$0xff]
          %v765 = vld [vmem:[%s426 + $0x8] sm:$0xff]
          %v766 = vld [vmem:[%s426 + $0x10] sm:$0xff]
          %v767 = vld [vmem:[%s426 + $0x18] sm:$0xff]
          %v768 = vld [vmem:[%s426 + $0x20] sm:$0xff]
          %v769 = vld [vmem:[%s426 + $0x28] sm:$0xff]
          %v770 = vld [vmem:[%s426 + $0x30] sm:$0xff]
          %v771 = vld [vmem:[%s426 + $0x38] sm:$0xff]
          %v772 = vld [vmem:[%s426 + $0x40] sm:$0xff]
          %v773 = vld [vmem:[%s426 + $0x48] sm:$0xff]
          %v774 = vld [vmem:[%s426 + $0x50] sm:$0xff]
          %v775 = vld [vmem:[%s426 + $0x58] sm:$0xff]
          %v776 = vld [vmem:[%s426 + $0x60] sm:$0xff]
          %v777 = vld [vmem:[%s426 + $0x68] sm:$0xff]
          %v778 = vld [vmem:[%s426 + $0x70] sm:$0xff]
          %v779 = vld [vmem:[%s426 + $0x78] sm:$0xff]
          %781 = vset.pattern.permute.xlu0 0
          %782 = vperm.xlu0 %781, %v764
          %v783 = vpop.permute.xlu0 %782
          %786 = vset.pattern.permute.xlu0 0
          %787 = vperm.xlu0 %786, %v765
          %v788 = vpop.permute.xlu0 %787
          %791 = vset.pattern.permute.xlu0 0
          %792 = vperm.xlu0 %791, %v766
          %v793 = vpop.permute.xlu0 %792
          %796 = vset.pattern.permute.xlu0 0
          %797 = vperm.xlu0 %796, %v767
          %v798 = vpop.permute.xlu0 %797
          %801 = vset.pattern.permute.xlu0 0
          %802 = vperm.xlu0 %801, %v768
          %v803 = vpop.permute.xlu0 %802
          %806 = vset.pattern.permute.xlu0 0
          %807 = vperm.xlu0 %806, %v769
          %v808 = vpop.permute.xlu0 %807
          %811 = vset.pattern.permute.xlu0 0
          %812 = vperm.xlu0 %811, %v770
          %v813 = vpop.permute.xlu0 %812
          %816 = vset.pattern.permute.xlu0 0
          %817 = vperm.xlu0 %816, %v771
          %v818 = vpop.permute.xlu0 %817
          %821 = vset.pattern.permute.xlu0 0
          %822 = vperm.xlu0 %821, %v772
          %v823 = vpop.permute.xlu0 %822
          %826 = vset.pattern.permute.xlu0 0
          %827 = vperm.xlu0 %826, %v773
          %v828 = vpop.permute.xlu0 %827
          %831 = vset.pattern.permute.xlu0 0
          %832 = vperm.xlu0 %831, %v774
          %v833 = vpop.permute.xlu0 %832
          %836 = vset.pattern.permute.xlu0 0
          %837 = vperm.xlu0 %836, %v775
          %v838 = vpop.permute.xlu0 %837
          %841 = vset.pattern.permute.xlu0 0
          %842 = vperm.xlu0 %841, %v776
          %v843 = vpop.permute.xlu0 %842
          %846 = vset.pattern.permute.xlu0 0
          %847 = vperm.xlu0 %846, %v777
          %v848 = vpop.permute.xlu0 %847
          %851 = vset.pattern.permute.xlu0 0
          %852 = vperm.xlu0 %851, %v778
          %v853 = vpop.permute.xlu0 %852
          %856 = vset.pattern.permute.xlu0 0
          %857 = vperm.xlu0 %856, %v779
          %v858 = vpop.permute.xlu0 %857
          %v860 = vmul.f32 %v748, %v783
          %v861 = vmul.f32 %v749, %v788
          %v862 = vmul.f32 %v750, %v793
          %v863 = vmul.f32 %v751, %v798
          %v864 = vmul.f32 %v752, %v803
          %v865 = vmul.f32 %v753, %v808
          %v866 = vmul.f32 %v754, %v813
          %v867 = vmul.f32 %v755, %v818
          %v868 = vmul.f32 %v756, %v823
          %v869 = vmul.f32 %v757, %v828
          %v870 = vmul.f32 %v758, %v833
          %v871 = vmul.f32 %v759, %v838
          %v872 = vmul.f32 %v760, %v843
          %v873 = vmul.f32 %v761, %v848
          %v874 = vmul.f32 %v762, %v853
          %v875 = vmul.f32 %v763, %v858
          %v876 = vld [vmem:[%s420] sm:$0xff]
          %v877 = vld [vmem:[%s420 + $0x8] sm:$0xff]
          %v878 = vld [vmem:[%s420 + $0x10] sm:$0xff]
          %v879 = vld [vmem:[%s420 + $0x18] sm:$0xff]
          %v880 = vld [vmem:[%s420 + $0x20] sm:$0xff]
          %v881 = vld [vmem:[%s420 + $0x28] sm:$0xff]
          %v882 = vld [vmem:[%s420 + $0x30] sm:$0xff]
          %v883 = vld [vmem:[%s420 + $0x38] sm:$0xff]
          %v884 = vld [vmem:[%s420 + $0x40] sm:$0xff]
          %v885 = vld [vmem:[%s420 + $0x48] sm:$0xff]
          %v886 = vld [vmem:[%s420 + $0x50] sm:$0xff]
          %v887 = vld [vmem:[%s420 + $0x58] sm:$0xff]
          %v888 = vld [vmem:[%s420 + $0x60] sm:$0xff]
          %v889 = vld [vmem:[%s420 + $0x68] sm:$0xff]
          %v890 = vld [vmem:[%s420 + $0x70] sm:$0xff]
          %v891 = vld [vmem:[%s420 + $0x78] sm:$0xff]
          %v892 = vld [vmem:[%s4] sm:$0xff]
          %v893 = vld [vmem:[%s4 + $0x8] sm:$0xff]
          %v894 = vld [vmem:[%s4 + $0x10] sm:$0xff]
          %v895 = vld [vmem:[%s4 + $0x18] sm:$0xff]
          %v896 = vld [vmem:[%s4 + $0x20] sm:$0xff]
          %v897 = vld [vmem:[%s4 + $0x28] sm:$0xff]
          %v898 = vld [vmem:[%s4 + $0x30] sm:$0xff]
          %v899 = vld [vmem:[%s4 + $0x38] sm:$0xff]
          %v900 = vld [vmem:[%s4 + $0x40] sm:$0xff]
          %v901 = vld [vmem:[%s4 + $0x48] sm:$0xff]
          %v902 = vld [vmem:[%s4 + $0x50] sm:$0xff]
          %v903 = vld [vmem:[%s4 + $0x58] sm:$0xff]
          %v904 = vld [vmem:[%s4 + $0x60] sm:$0xff]
          %v905 = vld [vmem:[%s4 + $0x68] sm:$0xff]
          %v906 = vld [vmem:[%s4 + $0x70] sm:$0xff]
          %v907 = vld [vmem:[%s4 + $0x78] sm:$0xff]
          %v908 = vld [vmem:[%s4 + $0x80] sm:$0xff]
          %v909 = vld [vmem:[%s4 + $0x88] sm:$0xff]
          %v910 = vld [vmem:[%s4 + $0x90] sm:$0xff]
          %v911 = vld [vmem:[%s4 + $0x98] sm:$0xff]
          %v912 = vld [vmem:[%s4 + $0xa0] sm:$0xff]
          %v913 = vld [vmem:[%s4 + $0xa8] sm:$0xff]
          %v914 = vld [vmem:[%s4 + $0xb0] sm:$0xff]
          %v915 = vld [vmem:[%s4 + $0xb8] sm:$0xff]
          %v916 = vld [vmem:[%s4 + $0xc0] sm:$0xff]
          %v917 = vld [vmem:[%s4 + $0xc8] sm:$0xff]
          %v918 = vld [vmem:[%s4 + $0xd0] sm:$0xff]
          %v919 = vld [vmem:[%s4 + $0xd8] sm:$0xff]
          %v920 = vld [vmem:[%s4 + $0xe0] sm:$0xff]
          %v921 = vld [vmem:[%s4 + $0xe8] sm:$0xff]
          %v922 = vld [vmem:[%s4 + $0xf0] sm:$0xff]
          %v923 = vld [vmem:[%s4 + $0xf8] sm:$0xff]
          %v924 = vld [vmem:[%s5] sm:$0x1]
          %v926 = vperm.slane %v924, 0
          %928 = vmatpush.msra.mxu0 %v907
          %929 = vmatpush.msra.mxu0 %v906
          %930 = vmatpush.msra.mxu0 %v905
          %931 = vmatpush.msra.mxu0 %v904
          %932 = vmatpush.msra.mxu0 %v903
          %933 = vmatpush.msra.mxu0 %v902
          %934 = vmatpush.msra.mxu0 %v901
          %935 = vmatpush.msra.mxu0 %v900
          %936 = vmatpush.msra.mxu0 %v899
          %937 = vmatpush.msra.mxu0 %v898
          %938 = vmatpush.msra.mxu0 %v897
          %939 = vmatpush.msra.mxu0 %v896
          %940 = vmatpush.msra.mxu0 %v895
          %941 = vmatpush.msra.mxu0 %v894
          %942 = vmatpush.msra.mxu0 %v893
          %943 = vmatpush.msra.mxu0 %v892
          %944 = vmatmul.f32.gmra.mxu0 %v860
          %v945 = vpop.f32.mrf.mxu0
          %v946 = vadd.f32 %v926, %v945
          %947 = vmatmul.f32.gmra.mxu0 %v861
          %v948 = vpop.f32.mrf.mxu0
          %v949 = vadd.f32 %v926, %v948
          %950 = vmatmul.f32.gmra.mxu0 %v862
          %v951 = vpop.f32.mrf.mxu0
          %v952 = vadd.f32 %v926, %v951
          %953 = vmatmul.f32.gmra.mxu0 %v863
          %v954 = vpop.f32.mrf.mxu0
          %v955 = vadd.f32 %v926, %v954
          %956 = vmatmul.f32.gmra.mxu0 %v864
          %v957 = vpop.f32.mrf.mxu0
          %v958 = vadd.f32 %v926, %v957
          %959 = vmatmul.f32.gmra.mxu0 %v865
          %v960 = vpop.f32.mrf.mxu0
          %v961 = vadd.f32 %v926, %v960
          %962 = vmatmul.f32.gmra.mxu0 %v866
          %v963 = vpop.f32.mrf.mxu0
          %v964 = vadd.f32 %v926, %v963
          %965 = vmatmul.f32.gmra.mxu0 %v867
          %v966 = vpop.f32.mrf.mxu0
          %v967 = vadd.f32 %v926, %v966
          %968 = vmatmul.f32.gmra.mxu0 %v868
          %v969 = vpop.f32.mrf.mxu0
          %v970 = vadd.f32 %v926, %v969
          %971 = vmatmul.f32.gmra.mxu0 %v869
          %v972 = vpop.f32.mrf.mxu0
          %v973 = vadd.f32 %v926, %v972
          %974 = vmatmul.f32.gmra.mxu0 %v870
          %v975 = vpop.f32.mrf.mxu0
          %v976 = vadd.f32 %v926, %v975
          %977 = vmatmul.f32.gmra.mxu0 %v871
          %v978 = vpop.f32.mrf.mxu0
          %v979 = vadd.f32 %v926, %v978
          %980 = vmatmul.f32.gmra.mxu0 %v872
          %v981 = vpop.f32.mrf.mxu0
          %v982 = vadd.f32 %v926, %v981
          %983 = vmatmul.f32.gmra.mxu0 %v873
          %v984 = vpop.f32.mrf.mxu0
          %v985 = vadd.f32 %v926, %v984
          %986 = vmatmul.f32.gmra.mxu0 %v874
          %v987 = vpop.f32.mrf.mxu0
          %v988 = vadd.f32 %v926, %v987
          %989 = vmatmul.f32.gmra.mxu0 %v875
          %v990 = vpop.f32.mrf.mxu0
          %v991 = vadd.f32 %v926, %v990
          %992 = vdwg.mxu0
          %993 = vmatpush.msra.mxu0 %v923
          %994 = vmatpush.msra.mxu0 %v922
          %995 = vmatpush.msra.mxu0 %v921
          %996 = vmatpush.msra.mxu0 %v920
          %997 = vmatpush.msra.mxu0 %v919
          %998 = vmatpush.msra.mxu0 %v918
          %999 = vmatpush.msra.mxu0 %v917
          %1000 = vmatpush.msra.mxu0 %v916
          %1001 = vmatpush.msra.mxu0 %v915
          %1002 = vmatpush.msra.mxu0 %v914
          %1003 = vmatpush.msra.mxu0 %v913
          %1004 = vmatpush.msra.mxu0 %v912
          %1005 = vmatpush.msra.mxu0 %v911
          %1006 = vmatpush.msra.mxu0 %v910
          %1007 = vmatpush.msra.mxu0 %v909
          %1008 = vmatpush.msra.mxu0 %v908
          %1009 = vmatmul.f32.gmra.mxu0 %v876
          %v1010 = vpop.f32.mrf.mxu0
          %v1011 = vadd.f32 %v946, %v1010
          %1012 = vmatmul.f32.gmra.mxu0 %v877
          %v1013 = vpop.f32.mrf.mxu0
          %v1014 = vadd.f32 %v949, %v1013
          %1015 = vmatmul.f32.gmra.mxu0 %v878
          %v1016 = vpop.f32.mrf.mxu0
          %v1017 = vadd.f32 %v952, %v1016
          %1018 = vmatmul.f32.gmra.mxu0 %v879
          %v1019 = vpop.f32.mrf.mxu0
          %v1020 = vadd.f32 %v955, %v1019
          %1021 = vmatmul.f32.gmra.mxu0 %v880
          %v1022 = vpop.f32.mrf.mxu0
          %v1023 = vadd.f32 %v958, %v1022
          %1024 = vmatmul.f32.gmra.mxu0 %v881
          %v1025 = vpop.f32.mrf.mxu0
          %v1026 = vadd.f32 %v961, %v1025
          %1027 = vmatmul.f32.gmra.mxu0 %v882
          %v1028 = vpop.f32.mrf.mxu0
          %v1029 = vadd.f32 %v964, %v1028
          %1030 = vmatmul.f32.gmra.mxu0 %v883
          %v1031 = vpop.f32.mrf.mxu0
          %v1032 = vadd.f32 %v967, %v1031
          %1033 = vmatmul.f32.gmra.mxu0 %v884
          %v1034 = vpop.f32.mrf.mxu0
          %v1035 = vadd.f32 %v970, %v1034
          %1036 = vmatmul.f32.gmra.mxu0 %v885
          %v1037 = vpop.f32.mrf.mxu0
          %v1038 = vadd.f32 %v973, %v1037
          %1039 = vmatmul.f32.gmra.mxu0 %v886
          %v1040 = vpop.f32.mrf.mxu0
          %v1041 = vadd.f32 %v976, %v1040
          %1042 = vmatmul.f32.gmra.mxu0 %v887
          %v1043 = vpop.f32.mrf.mxu0
          %v1044 = vadd.f32 %v979, %v1043
          %1045 = vmatmul.f32.gmra.mxu0 %v888
          %v1046 = vpop.f32.mrf.mxu0
          %v1047 = vadd.f32 %v982, %v1046
          %1048 = vmatmul.f32.gmra.mxu0 %v889
          %v1049 = vpop.f32.mrf.mxu0
          %v1050 = vadd.f32 %v985, %v1049
          %1051 = vmatmul.f32.gmra.mxu0 %v890
          %v1052 = vpop.f32.mrf.mxu0
          %v1053 = vadd.f32 %v988, %v1052
          %1054 = vmatmul.f32.gmra.mxu0 %v891
          %v1055 = vpop.f32.mrf.mxu0
          %v1056 = vadd.f32 %v991, %v1055
          %1057 = vdwg.mxu0
          %1058 = vst [vmem:[%s432] sm:$0xff] %v1011
          %1059 = vst [vmem:[%s432 + $0x8] sm:$0xff] %v1014
          %1060 = vst [vmem:[%s432 + $0x10] sm:$0xff] %v1017
          %1061 = vst [vmem:[%s432 + $0x18] sm:$0xff] %v1020
          %1062 = vst [vmem:[%s432 + $0x20] sm:$0xff] %v1023
          %1063 = vst [vmem:[%s432 + $0x28] sm:$0xff] %v1026
          %1064 = vst [vmem:[%s432 + $0x30] sm:$0xff] %v1029
          %1065 = vst [vmem:[%s432 + $0x38] sm:$0xff] %v1032
          %1066 = vst [vmem:[%s432 + $0x40] sm:$0xff] %v1035
          %1067 = vst [vmem:[%s432 + $0x48] sm:$0xff] %v1038
          %1068 = vst [vmem:[%s432 + $0x50] sm:$0xff] %v1041
          %1069 = vst [vmem:[%s432 + $0x58] sm:$0xff] %v1044
          %1070 = vst [vmem:[%s432 + $0x60] sm:$0xff] %v1047
          %1071 = vst [vmem:[%s432 + $0x68] sm:$0xff] %v1050
          %1072 = vst [vmem:[%s432 + $0x70] sm:$0xff] %v1053
          %1073 = vst [vmem:[%s432 + $0x78] sm:$0xff] %v1056
        $region90: #{graphsage_forward.3} parent=77 // pred_fallthru
          _
        %s1074 = smul.u32 16, %s21
        %p1075 = scmp.lt.s32.totalorder %s1074, 63
        %s1076 = scalar_select %p1075, %s1074, 63
        %s1077 = smul.addr %s1076, 8
        %s1078 = scalar_lea.vmem %s6, %s1077
        // Predicated region
        $region91: #{graphsage_forward.3} parent=77 // pred_check
          %p1079 = pneg %p195
        $region92: #{graphsage_forward.3} parent=77 // pred_check_branch
          %1081 = sbr.rel (%p1079) target = $region94
        $region93: #{graphsage_forward.3} parent=77 // pred_region
          %s1082 = smul.u32 16, %s21
        $region94: #{graphsage_forward.3} parent=77 // pred_fallthru
          _
      $region78: #{graphsage_forward.3} parent=5 // pred_fallthru
        _
      %p1083 = scmp.le.s32.totalorder 2, %s12
      // Predicated region
      $region95: #{graphsage_forward.3} parent=5 // pred_check
        %p1084 = pneg %p1083
      $region96: #{graphsage_forward.3} parent=5 // pred_check_branch
        %1086 = sbr.rel (%p1084) target = $region98
      $region97: #{graphsage_forward.3} parent=5 // pred_region
        %s1087 = ssub.s32 %s12, 2
        // Predicated region
        $region99: #{graphsage_forward.3} parent=97 // pred_check
          %p1088 = pneg %p201
        $region100: #{graphsage_forward.3} parent=97 // pred_check_branch
          %1090 = sbr.rel (%p1088) target = $region102
        $region101: #{graphsage_forward.3} parent=97 // pred_region
          %s1091 = smul.u32 16, %s23
          %p1092 = scmp.lt.s32.totalorder %s1091, 63
          %s1093 = scalar_select %p1092, %s1091, 63
          %s1094 = smul.addr %s1093, 8
          %s1095 = scalar_lea.vmem %s6, %s1094
        $region102: #{graphsage_forward.3} parent=97 // pred_fallthru
          _
      $region98: #{graphsage_forward.3} parent=5 // pred_fallthru
        _
    $region6: #{graphsage_forward.3} parent=1 // loop_footer
      %s16 = sadd.s32 1, %s12
    $region7: #{graphsage_forward.3} parent=1 // loop_footer_branch
      %11 = sbr.rel target = $region3
    $region8: #{graphsage_forward.3} parent=1 // loop_exit
      _

</llo_original>
